<compile_context>
chip_gen: v6e
topology: v6e:2x2x1
jax: 0.10.0
libtpu: 0.0.40
codegen_flags: <defaults>
</compile_context>

<pallas_src>
import functools

import jax
import jax.numpy as jnp
from jax.experimental import pallas as pl
from jax.experimental.pallas import tpu as pltpu

EPS = 1e-5  # PyTorch BatchNorm2d default


# -----------------------------------------------------------------------------
# In-kernel helpers
# -----------------------------------------------------------------------------
def _softmax(a, axis):
    """Softmax along `axis` in f32; divide is done via the EUP reciprocal."""
    m = jnp.max(a, axis=axis, keepdims=True)
    e = jnp.exp(a - m)
    s = jnp.sum(e, axis=axis, keepdims=True)
    return e * pl.reciprocal(s, approx=True)


# -----------------------------------------------------------------------------
# Pallas kernel: one batch element per grid step. Activations are (C, N).
# -----------------------------------------------------------------------------
def _stam_kernel(x1_ref, x2_ref,
                 wproj_ref, bproj_ref,   # fused [g; theta; phi]: (3Ci, C), (3Ci, 1)
                 ww_ref, bw_ref,         # W (conv1x1 + BN folded): (C, Ci), (C, 1)
                 o1_ref, o2_ref,
                 *, ci, n, mxu_dtype):
    f32 = jnp.float32
    md = mxu_dtype

    x1 = x1_ref[...]                                   # (C, N)  f32
    x2 = x2_ref[...]                                   # (C, N)  f32

    # ---- fused 1x1 convs (BN pre-folded): ONE matmul for g/theta/phi on both
    #      inputs: (3Ci, C) @ (C, 2N).
    xcat = jnp.concatenate([x1, x2], axis=1).astype(md)                      # (C, 2N)
    proj = jnp.dot(wproj_ref[...].astype(md), xcat,
                   preferred_element_type=f32) + bproj_ref[...]              # (3Ci, 2N) f32

    g1 = proj[0 * ci:1 * ci, :n]       # g(x1)      = g_x11     (Ci, N)
    g2 = proj[0 * ci:1 * ci, n:]       # g(x2)      = g_x21     (Ci, N)
    t1 = proj[1 * ci:2 * ci, :n]       # theta(x1)  = theta_x1  (Ci, N)
    p1 = proj[2 * ci:3 * ci, n:]       # phi(x2)    = phi_x1    (Ci, N)

    t1m = t1.astype(md)
    p1m = p1.astype(md)

    # ---- temporal energy (Ci, Ci): computed once; both softmaxes derived.
    #      energy_time_1 = theta_x1 @ phi_x2
    et = jnp.einsum('cn,dn->cd', t1m, p1m, preferred_element_type=f32)
    at1 = _softmax(et, axis=-1)   # energy_time_1s
    ct2 = _softmax(et, axis=0)    # energy_time_2s^T  (col-softmax of et)

    # ---- spatial energy (N, N): computed ONCE; both normalizations reuse it.
    #      energy_space_1 = theta_x2 @ phi_x1
    es = jnp.einsum('cn,cm->nm', t1m, p1m, preferred_element_type=f32)       # (N, N) f32
    s_col = _softmax(es, axis=0)    # energy_space_2s
    s_row = _softmax(es, axis=-1)   # energy_space_1s^T (used via trans-B contraction)

    # ---- y1 = (energy_time_2s @ g_x11) @ energy_space_2s          -> (Ci, N)
    z1 = jnp.einsum('dc,dn->cn', ct2.astype(md), g1.astype(md),
                    preferred_element_type=f32)
    y1 = jnp.dot(z1.astype(md), s_col.astype(md), preferred_element_type=f32)

    # ---- y2 = (energy_time_1s @ g_x21) @ energy_space_1s          -> (Ci, N)
    #      energy_space_1s = s_row^T, consumed without materializing it.
    z2 = jnp.dot(at1.astype(md), g2.astype(md), preferred_element_type=f32)
    y2 = jnp.einsum('cm,jm->cj', z2.astype(md), s_row.astype(md),
                    preferred_element_type=f32)

    # ---- fused final W projection (conv1x1 + BN folded) for both streams,
    #      then residual add (residual stays in f32).
    ycat = jnp.concatenate([y1, y2], axis=1).astype(md)                      # (Ci, 2N)
    wy = jnp.dot(ww_ref[...].astype(md), ycat,
                 preferred_element_type=f32) + bw_ref[...]                   # (C, 2N) f32

    o1_ref[...] = x1 + wy[:, :n]
    o2_ref[...] = x2 + wy[:, n:]


# -----------------------------------------------------------------------------
# Wrapper: free NCHW -> (B, C, N) reshape (no transposes) + pallas_call
# -----------------------------------------------------------------------------
def stam_forward(x1_nchw, x2_nchw, params, *, mxu_dtype=jnp.bfloat16):
    B, C, H, W = x1_nchw.shape
    N = H * W
    Ci = params['w_all'].shape[0] // 3

    x1 = x1_nchw.reshape(B, C, N)      # free reshape (channels on sublane, N on lanes)
    x2 = x2_nchw.reshape(B, C, N)

    act_spec = pl.BlockSpec((None, C, N), lambda b: (b, 0, 0))

    def full2d(a):
        return pl.BlockSpec(a.shape, lambda b: (0, 0))

    kernel = functools.partial(_stam_kernel, ci=Ci, n=N, mxu_dtype=mxu_dtype)

    o1, o2 = pl.pallas_call(
        kernel,
        grid=(B,),
        in_specs=[act_spec, act_spec,
                  full2d(params['w_all']), full2d(params['b_all']),
                  full2d(params['ww']), full2d(params['bw'])],
        out_specs=(act_spec, act_spec),
        out_shape=(jax.ShapeDtypeStruct((B, C, N), jnp.float32),
                   jax.ShapeDtypeStruct((B, C, N), jnp.float32)),
        compiler_params=pltpu.CompilerParams(
            dimension_semantics=("parallel",),
            # Explicit VMEM headroom (above v5e's 16 MiB default scoped limit);
            # large-N configs should use the flash-style tiling (see TODO above).
            vmem_limit_bytes=32 * 1024 * 1024),
    )(x1, x2, params['w_all'], params['b_all'], params['ww'], params['bw'])

    return o1.reshape(B, C, H, W), o2.reshape(B, C, H, W)


# -----------------------------------------------------------------------------
# Parameter creation (deterministic) and BN folding (glue, plain JAX)
# -----------------------------------------------------------------------------
def make_raw_params(key, C, Ci):
    keys = iter(jax.random.split(key, 24))

    def nrm(shape, s=0.2):
        return jax.random.normal(next(keys), shape, jnp.float32) * s

    def bn_params(n):
        return dict(gamma=1.0 + nrm((n,), 0.1), beta=nrm((n,), 0.1),
                    mean=nrm((n,), 0.1), var=1.0 + jnp.abs(nrm((n,), 0.1)))

    raw = {}
    for name in ('g', 't', 'p'):   # g / theta / phi: BN(C) -> conv1x1(C->Ci)
        raw[name] = dict(bn=bn_params(C), w=nrm((Ci, C)), b=nrm((Ci,), 0.1))
    raw['w'] = dict(bn=bn_params(C), w=nrm((C, Ci)), b=nrm((C,), 0.1))  # conv1x1(Ci->C) -> BN(C)
    return raw


def _fold_pre_bn_conv(bn, w, b):
    # eval-mode BN followed by 1x1 conv; produces W_eff, b_eff for `W_eff @ x + b_eff`.
    scale = bn['gamma'] / jnp.sqrt(bn['var'] + EPS)          # (Cin,)
    shift = bn['beta'] - bn['mean'] * scale                  # (Cin,)
    w_eff = w * scale[None, :]                               # (Cout, Cin)
    b_eff = b + w @ shift                                    # (Cout,)
    return w_eff, b_eff


def _fold_conv_post_bn(w, b, bn):
    # 1x1 conv followed by eval-mode BN; produces W_eff, b_eff for `W_eff @ y + b_eff`.
    scale = bn['gamma'] / jnp.sqrt(bn['var'] + EPS)          # (Cout,)
    w_eff = w * scale[:, None]                               # (Cout, Cin)
    b_eff = scale * (b - bn['mean']) + bn['beta']            # (Cout,)
    return w_eff, b_eff


def fold_params(raw):
    wg, bg = _fold_pre_bn_conv(raw['g']['bn'], raw['g']['w'], raw['g']['b'])
    wt, bt = _fold_pre_bn_conv(raw['t']['bn'], raw['t']['w'], raw['t']['b'])
    wp, bp = _fold_pre_bn_conv(raw['p']['bn'], raw['p']['w'], raw['p']['b'])
    ww, bw = _fold_conv_post_bn(raw['w']['w'], raw['w']['b'], raw['w']['bn'])
    w_all = jnp.concatenate([wg, wt, wp], axis=0)              # (3Ci, C)
    b_all = jnp.concatenate([bg, bt, bp], axis=0)[:, None]     # (3Ci, 1)
    return dict(w_all=w_all, b_all=b_all, ww=ww, bw=bw[:, None])


# -----------------------------------------------------------------------------
# Pure-JAX reference mirroring the PyTorch forward exactly (NCHW, unfolded BN)
# -----------------------------------------------------------------------------
def reference(x1, x2, raw, Ci):
    def bn(x, p):
        return (p['gamma'][None, :, None, None]
                * (x - p['mean'][None, :, None, None])
                / jnp.sqrt(p['var'][None, :, None, None] + EPS)
                + p['beta'][None, :, None, None])

    def conv1x1(x, w, b):
        return jnp.einsum('bchw,oc->bohw', x, w) + b[None, :, None, None]

    g = lambda x: conv1x1(bn(x, raw['g']['bn']), raw['g']['w'], raw['g']['b'])
    theta = lambda x: conv1x1(bn(x, raw['t']['bn']), raw['t']['w'], raw['t']['b'])
    phi = lambda x: conv1x1(bn(x, raw['p']['bn']), raw['p']['w'], raw['p']['b'])
    Wm = lambda y: bn(conv1x1(y, raw['w']['w'], raw['w']['b']), raw['w']['bn'])

    B, _, H, W = x1.shape
    flat = lambda a: a.reshape(B, a.shape[1], -1)
    g11, g21 = flat(g(x1)), flat(g(x2))
    th1, ph1 = flat(theta(x1)), flat(phi(x2))
    th2 = jnp.transpose(th1, (0, 2, 1))
    ph2 = jnp.transpose(ph1, (0, 2, 1))
    et1 = jnp.matmul(th1, ph2)
    et2 = jnp.transpose(et1, (0, 2, 1))
    es1 = jnp.matmul(th2, ph1)
    es2 = jnp.transpose(es1, (0, 2, 1))
    et1s = jax.nn.softmax(et1, axis=-1)
    et2s = jax.nn.softmax(et2, axis=-1)
    es2s = jax.nn.softmax(es1, axis=-2)
    es1s = jax.nn.softmax(es2, axis=-2)
    y1 = jnp.matmul(jnp.matmul(et2s, g11), es2s).reshape(B, Ci, H, W)
    y2 = jnp.matmul(jnp.matmul(et1s, g21), es1s).reshape(B, Ci, H, W)
    return x1 + Wm(y1), x2 + Wm(y2)


# -----------------------------------------------------------------------------
if __name__ == "__main__":
    key = jax.random.PRNGKey(0)
    B, C, H, W = 2, 4, 16, 16
    Ci = C // 2

    k1, k2, kp = jax.random.split(key, 3)
    x1 = jax.random.normal(k1, (B, C, H, W), jnp.float32)
    x2 = jax.random.normal(k2, (B, C, H, W), jnp.float32)

    raw = make_raw_params(kp, C, Ci)
    params = fold_params(raw)
    r1, r2 = reference(x1, x2, raw, Ci)

    # f32 MXU path: tight numerical check (slack covers the EUP approx reciprocal).
    o1, o2 = stam_forward(x1, x2, params, mxu_dtype=jnp.float32)
    jax.block_until_ready((o1, o2))
    assert o1.shape == (B, C, H, W) and o2.shape == (B, C, H, W)
    assert jnp.allclose(o1, r1, rtol=3e-3, atol=3e-3), float(jnp.max(jnp.abs(o1 - r1)))
    assert jnp.allclose(o2, r2, rtol=3e-3, atol=3e-3), float(jnp.max(jnp.abs(o2 - r2)))

    # bf16 MXU path (v6e/v7x fast path, f32 accumulation/softmax): looser check.
    b1, b2 = stam_forward(x1, x2, params, mxu_dtype=jnp.bfloat16)
    jax.block_until_ready((b1, b2))
    assert jnp.allclose(b1, r1, rtol=3e-2, atol=3e-2), float(jnp.max(jnp.abs(b1 - r1)))
    assert jnp.allclose(b2, r2, rtol=3e-2, atol=3e-2), float(jnp.max(jnp.abs(b2 - r2)))

    print("KERNEL_OK")
</pallas_src>

<mosaic_0001>
module attributes {stable_mosaic.version = 11 : i64} {
  func.func @_stam_kernel(%arg0: i32, %arg1: memref<1x4x256xf32, #tpu.memory_space<vmem>>, %arg2: memref<1x4x256xf32, #tpu.memory_space<vmem>>, %arg3: memref<6x4xf32, #tpu.memory_space<vmem>>, %arg4: memref<6x1xf32, #tpu.memory_space<vmem>>, %arg5: memref<4x2xf32, #tpu.memory_space<vmem>>, %arg6: memref<4x1xf32, #tpu.memory_space<vmem>>, %arg7: memref<1x4x256xf32, #tpu.memory_space<vmem>>, %arg8: memref<1x4x256xf32, #tpu.memory_space<vmem>>) attributes {dimension_semantics = [#tpu.dimension_semantics<parallel>], iteration_bounds = array<i64: 2>, scalar_prefetch = 0 : i64, scratch_operands = 0 : i64, tpu.core_type = #tpu.core_type<tc>, window_params = [{transform_indices = @transform_0, window_bounds = array<i64: 1, 4, 256>}, {transform_indices = @transform_1, window_bounds = array<i64: 1, 4, 256>}, {pipeline_mode = #tpu.pipeline_mode<synchronous>, transform_indices = @transform_2, window_bounds = array<i64: 6, 4>}, {pipeline_mode = #tpu.pipeline_mode<synchronous>, transform_indices = @transform_3, window_bounds = array<i64: 6, 1>}, {pipeline_mode = #tpu.pipeline_mode<synchronous>, transform_indices = @transform_4, window_bounds = array<i64: 4, 2>}, {pipeline_mode = #tpu.pipeline_mode<synchronous>, transform_indices = @transform_5, window_bounds = array<i64: 4, 1>}, {transform_indices = @transform_6, window_bounds = array<i64: 1, 4, 256>}, {transform_indices = @transform_7, window_bounds = array<i64: 1, 4, 256>}]} {
    %c0 = arith.constant 0 : index
    %c0_0 = arith.constant 0 : index
    %c0_1 = arith.constant 0 : index
    %0 = vector.load %arg1[%c0, %c0_0, %c0_1] : memref<1x4x256xf32, #tpu.memory_space<vmem>>, vector<1x4x256xf32>
    %1 = vector.shape_cast %0 : vector<1x4x256xf32> to vector<4x256xf32>
    %c0_2 = arith.constant 0 : index
    %c0_3 = arith.constant 0 : index
    %c0_4 = arith.constant 0 : index
    %2 = vector.load %arg2[%c0_2, %c0_3, %c0_4] : memref<1x4x256xf32, #tpu.memory_space<vmem>>, vector<1x4x256xf32>
    %3 = vector.shape_cast %2 : vector<1x4x256xf32> to vector<4x256xf32>
    %4 = tpu.concatenate %1, %3 in 1 : vector<4x256xf32>, vector<4x256xf32> -> vector<4x512xf32>
    %c0_5 = arith.constant 0 : index
    %c0_6 = arith.constant 0 : index
    %5 = vector.load %arg3[%c0_5, %c0_6] : memref<6x4xf32, #tpu.memory_space<vmem>>, vector<6x4xf32>
    %cst = arith.constant dense<0.000000e+00> : vector<6x512xf32>
    %6 = tpu.matmul %5, %4, %cst {dimension_numbers = #tpu.dot_dimension_numbers<[1], [0], [0], [1], [0, 0, 1, 1], [], []>} : vector<6x4xf32>, vector<4x512xf32>, vector<6x512xf32> -> vector<6x512xf32>
    %c0_7 = arith.constant 0 : index
    %c0_8 = arith.constant 0 : index
    %7 = vector.load %arg4[%c0_7, %c0_8] : memref<6x1xf32, #tpu.memory_space<vmem>>, vector<6x1xf32>
    %8 = vector.broadcast %7 : vector<6x1xf32> to vector<6x512xf32>
    %9 = arith.addf %6, %8 : vector<6x512xf32>
    %10 = vector.extract_strided_slice %9 {offsets = [0, 0], sizes = [2, 256], strides = [1, 1]} : vector<6x512xf32> to vector<2x256xf32>
    %11 = vector.extract_strided_slice %9 {offsets = [0, 256], sizes = [2, 256], strides = [1, 1]} : vector<6x512xf32> to vector<2x256xf32>
    %12 = vector.extract_strided_slice %9 {offsets = [2, 0], sizes = [2, 256], strides = [1, 1]} : vector<6x512xf32> to vector<2x256xf32>
    %13 = vector.extract_strided_slice %9 {offsets = [4, 256], sizes = [2, 256], strides = [1, 1]} : vector<6x512xf32> to vector<2x256xf32>
    "tpu.trace_start"() <{level = 10 : i32, message = "cn,dn->cd"}> : () -> ()
    %cst_9 = arith.constant dense<0.000000e+00> : vector<2x2xf32>
    %14 = tpu.matmul %12, %13, %cst_9 {dimension_numbers = #tpu.dot_dimension_numbers<[1], [1], [0], [0], [0, 0, 1, 0], [], []>} : vector<2x256xf32>, vector<2x256xf32>, vector<2x2xf32> -> vector<2x2xf32>
    "tpu.trace_stop"() : () -> ()
    %cst_10 = arith.constant dense<0xFF800000> : vector<2xf32>
    %15 = vector.multi_reduction <maximumf>, %14, %cst_10 [1] : vector<2x2xf32> to vector<2xf32>
    %16 = vector.shape_cast %15 : vector<2xf32> to vector<2x1xf32>
    %17 = vector.broadcast %16 : vector<2x1xf32> to vector<2x2xf32>
    %18 = arith.subf %14, %17 : vector<2x2xf32>
    %19 = math.exp %18 : vector<2x2xf32>
    %cst_11 = arith.constant dense<0.000000e+00> : vector<2xf32>
    %20 = vector.multi_reduction <add>, %19, %cst_11 [1] : vector<2x2xf32> to vector<2xf32>
    %21 = vector.shape_cast %20 : vector<2xf32> to vector<2x1xf32>
    %22 = tpu.reciprocal %21 {approx = true} : vector<2x1xf32> -> vector<2x1xf32>
    %23 = vector.broadcast %22 : vector<2x1xf32> to vector<2x2xf32>
    %24 = arith.mulf %19, %23 : vector<2x2xf32>
    %cst_12 = arith.constant dense<0xFF800000> : vector<2xf32>
    %25 = vector.multi_reduction <maximumf>, %14, %cst_12 [0] : vector<2x2xf32> to vector<2xf32>
    %26 = vector.shape_cast %25 : vector<2xf32> to vector<1x2xf32>
    %27 = vector.broadcast %26 : vector<1x2xf32> to vector<2x2xf32>
    %28 = arith.subf %14, %27 : vector<2x2xf32>
    %29 = math.exp %28 : vector<2x2xf32>
    %cst_13 = arith.constant dense<0.000000e+00> : vector<2xf32>
    %30 = vector.multi_reduction <add>, %29, %cst_13 [0] : vector<2x2xf32> to vector<2xf32>
    %31 = vector.shape_cast %30 : vector<2xf32> to vector<1x2xf32>
    %32 = tpu.reciprocal %31 {approx = true} : vector<1x2xf32> -> vector<1x2xf32>
    %33 = vector.broadcast %32 : vector<1x2xf32> to vector<2x2xf32>
    %34 = arith.mulf %29, %33 : vector<2x2xf32>
    "tpu.trace_start"() <{level = 10 : i32, message = "cn,cm->nm"}> : () -> ()
    %cst_14 = arith.constant dense<0.000000e+00> : vector<256x256xf32>
    %35 = tpu.matmul %12, %13, %cst_14 {dimension_numbers = #tpu.dot_dimension_numbers<[0], [0], [1], [1], [0, 1, 1, 1], [], []>} : vector<2x256xf32>, vector<2x256xf32>, vector<256x256xf32> -> vector<256x256xf32>
    "tpu.trace_stop"() : () -> ()
    %cst_15 = arith.constant dense<0xFF800000> : vector<256xf32>
    %36 = vector.multi_reduction <maximumf>, %35, %cst_15 [0] : vector<256x256xf32> to vector<256xf32>
    %37 = vector.shape_cast %36 : vector<256xf32> to vector<1x256xf32>
    %38 = vector.broadcast %37 : vector<1x256xf32> to vector<256x256xf32>
    %39 = arith.subf %35, %38 : vector<256x256xf32>
    %40 = math.exp %39 : vector<256x256xf32>
    %cst_16 = arith.constant dense<0.000000e+00> : vector<256xf32>
    %41 = vector.multi_reduction <add>, %40, %cst_16 [0] : vector<256x256xf32> to vector<256xf32>
    %42 = vector.shape_cast %41 : vector<256xf32> to vector<1x256xf32>
    %43 = tpu.reciprocal %42 {approx = true} : vector<1x256xf32> -> vector<1x256xf32>
    %44 = vector.broadcast %43 : vector<1x256xf32> to vector<256x256xf32>
    %45 = arith.mulf %40, %44 : vector<256x256xf32>
    %cst_17 = arith.constant dense<0xFF800000> : vector<256xf32>
    %46 = vector.multi_reduction <maximumf>, %35, %cst_17 [1] : vector<256x256xf32> to vector<256xf32>
    %47 = vector.shape_cast %46 : vector<256xf32> to vector<256x1xf32>
    %48 = vector.broadcast %47 : vector<256x1xf32> to vector<256x256xf32>
    %49 = arith.subf %35, %48 : vector<256x256xf32>
    %50 = math.exp %49 : vector<256x256xf32>
    %cst_18 = arith.constant dense<0.000000e+00> : vector<256xf32>
    %51 = vector.multi_reduction <add>, %50, %cst_18 [1] : vector<256x256xf32> to vector<256xf32>
    %52 = vector.shape_cast %51 : vector<256xf32> to vector<256x1xf32>
    %53 = tpu.reciprocal %52 {approx = true} : vector<256x1xf32> -> vector<256x1xf32>
    %54 = vector.broadcast %53 : vector<256x1xf32> to vector<256x256xf32>
    %55 = arith.mulf %50, %54 : vector<256x256xf32>
    "tpu.trace_start"() <{level = 10 : i32, message = "dc,dn->cn"}> : () -> ()
    %cst_19 = arith.constant dense<0.000000e+00> : vector<2x256xf32>
    %56 = tpu.matmul %34, %10, %cst_19 {dimension_numbers = #tpu.dot_dimension_numbers<[0], [0], [1], [1], [0, 1, 1, 1], [], []>} : vector<2x2xf32>, vector<2x256xf32>, vector<2x256xf32> -> vector<2x256xf32>
    "tpu.trace_stop"() : () -> ()
    %cst_20 = arith.constant dense<0.000000e+00> : vector<2x256xf32>
    %57 = tpu.matmul %56, %45, %cst_20 {dimension_numbers = #tpu.dot_dimension_numbers<[1], [0], [0], [1], [0, 0, 1, 1], [], []>} : vector<2x256xf32>, vector<256x256xf32>, vector<2x256xf32> -> vector<2x256xf32>
    %cst_21 = arith.constant dense<0.000000e+00> : vector<2x256xf32>
    %58 = tpu.matmul %24, %11, %cst_21 {dimension_numbers = #tpu.dot_dimension_numbers<[1], [0], [0], [1], [0, 0, 1, 1], [], []>} : vector<2x2xf32>, vector<2x256xf32>, vector<2x256xf32> -> vector<2x256xf32>
    "tpu.trace_start"() <{level = 10 : i32, message = "cm,jm->cj"}> : () -> ()
    %cst_22 = arith.constant dense<0.000000e+00> : vector<2x256xf32>
    %59 = tpu.matmul %58, %55, %cst_22 {dimension_numbers = #tpu.dot_dimension_numbers<[1], [1], [0], [0], [0, 0, 1, 0], [], []>} : vector<2x256xf32>, vector<256x256xf32>, vector<2x256xf32> -> vector<2x256xf32>
    "tpu.trace_stop"() : () -> ()
    %60 = tpu.concatenate %57, %59 in 1 : vector<2x256xf32>, vector<2x256xf32> -> vector<2x512xf32>
    %c0_23 = arith.constant 0 : index
    %c0_24 = arith.constant 0 : index
    %61 = vector.load %arg5[%c0_23, %c0_24] : memref<4x2xf32, #tpu.memory_space<vmem>>, vector<4x2xf32>
    %cst_25 = arith.constant dense<0.000000e+00> : vector<4x512xf32>
    %62 = tpu.matmul %61, %60, %cst_25 {dimension_numbers = #tpu.dot_dimension_numbers<[1], [0], [0], [1], [0, 0, 1, 1], [], []>} : vector<4x2xf32>, vector<2x512xf32>, vector<4x512xf32> -> vector<4x512xf32>
    %c0_26 = arith.constant 0 : index
    %c0_27 = arith.constant 0 : index
    %63 = vector.load %arg6[%c0_26, %c0_27] : memref<4x1xf32, #tpu.memory_space<vmem>>, vector<4x1xf32>
    %64 = vector.broadcast %63 : vector<4x1xf32> to vector<4x512xf32>
    %65 = arith.addf %62, %64 : vector<4x512xf32>
    %66 = vector.extract_strided_slice %65 {offsets = [0, 0], sizes = [4, 256], strides = [1, 1]} : vector<4x512xf32> to vector<4x256xf32>
    %67 = arith.addf %1, %66 : vector<4x256xf32>
    %c0_28 = arith.constant 0 : index
    %c0_29 = arith.constant 0 : index
    %c0_30 = arith.constant 0 : index
    %68 = vector.load %arg7[%c0_28, %c0_29, %c0_30] : memref<1x4x256xf32, #tpu.memory_space<vmem>>, vector<1x4x256xf32>
    %69 = vector.shape_cast %68 : vector<1x4x256xf32> to vector<4x256xf32>
    %70 = vector.shape_cast %67 : vector<4x256xf32> to vector<1x4x256xf32>
    tpu.vector_store %arg7[%c0_28, %c0_29, %c0_30], %70 {strides = array<i32>} : memref<1x4x256xf32, #tpu.memory_space<vmem>>, vector<1x4x256xf32>,
    %71 = vector.extract_strided_slice %65 {offsets = [0, 256], sizes = [4, 256], strides = [1, 1]} : vector<4x512xf32> to vector<4x256xf32>
    %72 = arith.addf %3, %71 : vector<4x256xf32>
    %c0_31 = arith.constant 0 : index
    %c0_32 = arith.constant 0 : index
    %c0_33 = arith.constant 0 : index
    %73 = vector.load %arg8[%c0_31, %c0_32, %c0_33] : memref<1x4x256xf32, #tpu.memory_space<vmem>>, vector<1x4x256xf32>
    %74 = vector.shape_cast %73 : vector<1x4x256xf32> to vector<4x256xf32>
    %75 = vector.shape_cast %72 : vector<4x256xf32> to vector<1x4x256xf32>
    tpu.vector_store %arg8[%c0_31, %c0_32, %c0_33], %75 {strides = array<i32>} : memref<1x4x256xf32, #tpu.memory_space<vmem>>, vector<1x4x256xf32>,
    return
  }
  func.func @transform_0(%arg0: i32) -> (i32, i32, i32) {
    %c0_i32 = arith.constant 0 : i32
    %c0_i32_0 = arith.constant 0 : i32
    %c0_i32_1 = arith.constant 0 : i32
    return %arg0, %c0_i32, %c0_i32_0 : i32, i32, i32
  }
  func.func @transform_1(%arg0: i32) -> (i32, i32, i32) {
    %c0_i32 = arith.constant 0 : i32
    %c0_i32_0 = arith.constant 0 : i32
    %c0_i32_1 = arith.constant 0 : i32
    return %arg0, %c0_i32, %c0_i32_0 : i32, i32, i32
  }
  func.func @transform_2(%arg0: i32) -> (i32, i32) {
    %c0_i32 = arith.constant 0 : i32
    %c0_i32_0 = arith.constant 0 : i32
    %c0_i32_1 = arith.constant 0 : i32
    return %c0_i32, %c0_i32_0 : i32, i32
  }
  func.func @transform_3(%arg0: i32) -> (i32, i32) {
    %c0_i32 = arith.constant 0 : i32
    %c0_i32_0 = arith.constant 0 : i32
    %c0_i32_1 = arith.constant 0 : i32
    return %c0_i32, %c0_i32_0 : i32, i32
  }
  func.func @transform_4(%arg0: i32) -> (i32, i32) {
    %c0_i32 = arith.constant 0 : i32
    %c0_i32_0 = arith.constant 0 : i32
    %c0_i32_1 = arith.constant 0 : i32
    return %c0_i32, %c0_i32_0 : i32, i32
  }
  func.func @transform_5(%arg0: i32) -> (i32, i32) {
    %c0_i32 = arith.constant 0 : i32
    %c0_i32_0 = arith.constant 0 : i32
    %c0_i32_1 = arith.constant 0 : i32
    return %c0_i32, %c0_i32_0 : i32, i32
  }
  func.func @transform_6(%arg0: i32) -> (i32, i32, i32) {
    %c0_i32 = arith.constant 0 : i32
    %c0_i32_0 = arith.constant 0 : i32
    %c0_i32_1 = arith.constant 0 : i32
    return %arg0, %c0_i32, %c0_i32_0 : i32, i32, i32
  }
  func.func @transform_7(%arg0: i32) -> (i32, i32, i32) {
    %c0_i32 = arith.constant 0 : i32
    %c0_i32_0 = arith.constant 0 : i32
    %c0_i32_1 = arith.constant 0 : i32
    return %arg0, %c0_i32, %c0_i32_0 : i32, i32, i32
  }
}

</mosaic_0001>

<llo_original>
// kernel: tpu_custom_call.1
$region0: #{tpu_custom_call.1}
  #allocation0 [shape = 'u32[]', space=smem, size = 0x4, offset = 0x4, fixed_abs, tag = 'smem constant byte address 0x4 - core index']
  #allocation1 [shape = 'u32[144,128]{1,0:T(1,128)}', space=vmem, size = 0x12000, scoped, tag = 'internal scratch']
  %s0 = inlined_call_operand.vmem [shape: f32[2,4,256], index: 0, kind: input, shape index: {}]
  %s1 = inlined_call_operand.vmem [shape: f32[2,4,256], index: 1, kind: input, shape index: {}]
  %s2 = inlined_call_operand.vmem [shape: f32[6,4], index: 2, kind: input, shape index: {}]
  %s3 = inlined_call_operand.vmem [shape: f32[6,1], index: 3, kind: input, shape index: {}]
  %s4 = inlined_call_operand.vmem [shape: f32[4,2], index: 4, kind: input, shape index: {}]
  %s5 = inlined_call_operand.vmem [shape: f32[4,1], index: 5, kind: input, shape index: {}]
  %s6 = inlined_call_operand.hbm [shape: f32[2,4,256], index: 6, kind: output, shape index: {0}]
  %s7 = inlined_call_operand.hbm [shape: f32[2,4,256], index: 7, kind: output, shape index: {1}]
  %8 = xla_tuple %s6, %s7
  %s9 = sld [smem:[#allocation0]]
  $region65: #{tpu_custom_call.1} parent=0
    _
  %s11 = ssub.s32 1, %s9
  %s12 = scalar_select 0, %s11, %s9
  $region1: #{tpu_custom_call.1} parent=0
    #allocation2 [shape = 'u8[8192]{0}', space=vmem, size = 0x2000, scoped, tag = 'output window, operand 0']
    #allocation3 [shape = 's32[2]{0}', space=sflag, size = 0x8, scoped, tag = 'scoped memory for tpu_custom_call.1']
    #allocation4 [shape = 'u8[8192]{0}', space=vmem, size = 0x2000, scoped, tag = 'output window, operand 1']
    #allocation5 [shape = 's32[2]{0}', space=sflag, size = 0x8, scoped, tag = 'scoped memory for tpu_custom_call.1']
    %13 = vsyncpa [#allocation3], 0
    %s14 = scalar_lea.sflag [#allocation3], 1
    %15 = vsyncpa %s14, 0
    %16 = vsyncpa [#allocation5], 0
    %s17 = scalar_lea.sflag [#allocation5], 1
    %18 = vsyncpa %s17, 0
    loop: start=0, step=1, limit=4
    $region2: #{tpu_custom_call.1} parent=1 // loop_pre_header
      _
    $region3: #{tpu_custom_call.1} parent=1 // loop_header
      %s20 = sphi 0, %s24
      %p21 = scmp.ge.s32.totalorder %s20, 4
      %s30 = sphi 0, %s32
      %s33 = sphi 0, %s30
      %s34 = sphi 0, %s33
      %s50 = sphi 0, %s34
      %s56 = sphi 0, %s58
      %s59 = sphi 0, %s56
      %s60 = sphi 0, %s59
      %s76 = sphi 0, %s60
      %s80 = sphi 0, %s80
      %s82 = sphi 0, %s80
      %s83 = sphi 0, %s82
      %s97 = sphi 0, %s83
      %s101 = sphi 0, %s101
      %s103 = sphi 0, %s101
      %s104 = sphi 0, %s103
      %s118 = sphi 0, %s104
      %s122 = sphi 0, %s122
      %s124 = sphi 0, %s122
      %s125 = sphi 0, %s124
      %s139 = sphi 0, %s125
      %s143 = sphi 0, %s143
      %s145 = sphi 0, %s143
      %s146 = sphi 0, %s145
      %s160 = sphi 0, %s146
      %s166 = sphi 0, %s168
      %s169 = sphi 0, %s166
      %s170 = sphi 0, %s169
      %s186 = sphi 0, %s170
      %s192 = sphi 0, %s194
      %s195 = sphi 0, %s192
      %s196 = sphi 0, %s195
      %s212 = sphi 0, %s196
    $region4: #{tpu_custom_call.1} parent=1 // loop_header_branch
      %23 = sbr.rel (%p21) target = $region8
    $region5: #{tpu_custom_call.1} parent=1 // loop_body
      %s25 = ssub.s32 %s20, 1
      %s26 = ssub.s32 %s20, 2
      %s27 = sadd.s32 %s20, 1
      %s28 = ssub.s32 %s20, %s27
      %p29 = scmp.eq.s32.totalorder %s28, 0
      %s31 = sadd.s32 %s30, 1
      %s32 = scalar_select %p29, %s30, %s31
      %p35 = pneg %p29
      %p36 = scmp.eq.s32.totalorder %s20, 1
      %p37 = por %p35, %p36
      %p38 = scmp.ne.s32.totalorder %s30, %s33
      %p39 = scmp.eq.s32.totalorder %s20, 0
      %p40 = por %p38, %p39
      %p41 = scmp.ne.s32.totalorder %s30, %s33
      %p42 = scmp.eq.s32.totalorder %s25, 1
      %p43 = por %p41, %p42
      %p44 = scmp.ne.s32.totalorder %s33, %s34
      %p45 = scmp.eq.s32.totalorder %s25, 0
      %p46 = por %p44, %p45
      %p47 = scmp.ne.s32.totalorder %s33, %s34
      %p48 = scmp.eq.s32.totalorder %s26, 1
      %p49 = por %p47, %p48
      %p51 = scmp.ne.s32.totalorder %s34, %s50
      %p52 = scmp.eq.s32.totalorder %s26, 0
      %p53 = por %p51, %p52
      %s54 = ssub.s32 %s20, %s27
      %p55 = scmp.eq.s32.totalorder %s54, 0
      %s57 = sadd.s32 %s56, 1
      %s58 = scalar_select %p55, %s56, %s57
      %p61 = pneg %p55
      %p62 = scmp.eq.s32.totalorder %s20, 1
      %p63 = por %p61, %p62
      %p64 = scmp.ne.s32.totalorder %s56, %s59
      %p65 = scmp.eq.s32.totalorder %s20, 0
      %p66 = por %p64, %p65
      %p67 = scmp.ne.s32.totalorder %s56, %s59
      %p68 = scmp.eq.s32.totalorder %s25, 1
      %p69 = por %p67, %p68
      %p70 = scmp.ne.s32.totalorder %s59, %s60
      %p71 = scmp.eq.s32.totalorder %s25, 0
      %p72 = por %p70, %p71
      %p73 = scmp.ne.s32.totalorder %s59, %s60
      %p74 = scmp.eq.s32.totalorder %s26, 1
      %p75 = por %p73, %p74
      %p77 = scmp.ne.s32.totalorder %s60, %s76
      %p78 = scmp.eq.s32.totalorder %s26, 0
      %p79 = por %p77, %p78
      %s81 = sadd.s32 %s80, 1
      %p84 = scmp.eq.s32.totalorder %s20, 1
      %p85 = scmp.ne.s32.totalorder %s80, %s82
      %p86 = scmp.eq.s32.totalorder %s20, 0
      %p87 = por %p85, %p86
      %p88 = scmp.ne.s32.totalorder %s80, %s82
      %p89 = scmp.eq.s32.totalorder %s25, 1
      %p90 = por %p88, %p89
      %p91 = scmp.ne.s32.totalorder %s82, %s83
      %p92 = scmp.eq.s32.totalorder %s25, 0
      %p93 = por %p91, %p92
      %p94 = scmp.ne.s32.totalorder %s82, %s83
      %p95 = scmp.eq.s32.totalorder %s26, 1
      %p96 = por %p94, %p95
      %p98 = scmp.ne.s32.totalorder %s83, %s97
      %p99 = scmp.eq.s32.totalorder %s26, 0
      %p100 = por %p98, %p99
      %s102 = sadd.s32 %s101, 1
      %p105 = scmp.eq.s32.totalorder %s20, 1
      %p106 = scmp.ne.s32.totalorder %s101, %s103
      %p107 = scmp.eq.s32.totalorder %s20, 0
      %p108 = por %p106, %p107
      %p109 = scmp.ne.s32.totalorder %s101, %s103
      %p110 = scmp.eq.s32.totalorder %s25, 1
      %p111 = por %p109, %p110
      %p112 = scmp.ne.s32.totalorder %s103, %s104
      %p113 = scmp.eq.s32.totalorder %s25, 0
      %p114 = por %p112, %p113
      %p115 = scmp.ne.s32.totalorder %s103, %s104
      %p116 = scmp.eq.s32.totalorder %s26, 1
      %p117 = por %p115, %p116
      %p119 = scmp.ne.s32.totalorder %s104, %s118
      %p120 = scmp.eq.s32.totalorder %s26, 0
      %p121 = por %p119, %p120
      %s123 = sadd.s32 %s122, 1
      %p126 = scmp.eq.s32.totalorder %s20, 1
      %p127 = scmp.ne.s32.totalorder %s122, %s124
      %p128 = scmp.eq.s32.totalorder %s20, 0
      %p129 = por %p127, %p128
      %p130 = scmp.ne.s32.totalorder %s122, %s124
      %p131 = scmp.eq.s32.totalorder %s25, 1
      %p132 = por %p130, %p131
      %p133 = scmp.ne.s32.totalorder %s124, %s125
      %p134 = scmp.eq.s32.totalorder %s25, 0
      %p135 = por %p133, %p134
      %p136 = scmp.ne.s32.totalorder %s124, %s125
      %p137 = scmp.eq.s32.totalorder %s26, 1
      %p138 = por %p136, %p137
      %p140 = scmp.ne.s32.totalorder %s125, %s139
      %p141 = scmp.eq.s32.totalorder %s26, 0
      %p142 = por %p140, %p141
      %s144 = sadd.s32 %s143, 1
      %p147 = scmp.eq.s32.totalorder %s20, 1
      %p148 = scmp.ne.s32.totalorder %s143, %s145
      %p149 = scmp.eq.s32.totalorder %s20, 0
      %p150 = por %p148, %p149
      %p151 = scmp.ne.s32.totalorder %s143, %s145
      %p152 = scmp.eq.s32.totalorder %s25, 1
      %p153 = por %p151, %p152
      %p154 = scmp.ne.s32.totalorder %s145, %s146
      %p155 = scmp.eq.s32.totalorder %s25, 0
      %p156 = por %p154, %p155
      %p157 = scmp.ne.s32.totalorder %s145, %s146
      %p158 = scmp.eq.s32.totalorder %s26, 1
      %p159 = por %p157, %p158
      %p161 = scmp.ne.s32.totalorder %s146, %s160
      %p162 = scmp.eq.s32.totalorder %s26, 0
      %p163 = por %p161, %p162
      %s164 = ssub.s32 %s20, %s27
      %p165 = scmp.eq.s32.totalorder %s164, 0
      %s167 = sadd.s32 %s166, 1
      %s168 = scalar_select %p165, %s166, %s167
      %p171 = pneg %p165
      %p172 = scmp.eq.s32.totalorder %s20, 1
      %p173 = por %p171, %p172
      %p174 = scmp.ne.s32.totalorder %s166, %s169
      %p175 = scmp.eq.s32.totalorder %s20, 0
      %p176 = por %p174, %p175
      %p177 = scmp.ne.s32.totalorder %s166, %s169
      %p178 = scmp.eq.s32.totalorder %s25, 1
      %p179 = por %p177, %p178
      %p180 = scmp.ne.s32.totalorder %s169, %s170
      %p181 = scmp.eq.s32.totalorder %s25, 0
      %p182 = por %p180, %p181
      %p183 = scmp.ne.s32.totalorder %s169, %s170
      %p184 = scmp.eq.s32.totalorder %s26, 1
      %p185 = por %p183, %p184
      %p187 = scmp.ne.s32.totalorder %s170, %s186
      %p188 = scmp.eq.s32.totalorder %s26, 0
      %p189 = por %p187, %p188
      %s190 = ssub.s32 %s20, %s27
      %p191 = scmp.eq.s32.totalorder %s190, 0
      %s193 = sadd.s32 %s192, 1
      %s194 = scalar_select %p191, %s192, %s193
      %p197 = pneg %p191
      %p198 = scmp.eq.s32.totalorder %s20, 1
      %p199 = por %p197, %p198
      %p200 = scmp.ne.s32.totalorder %s192, %s195
      %p201 = scmp.eq.s32.totalorder %s20, 0
      %p202 = por %p200, %p201
      %p203 = scmp.ne.s32.totalorder %s192, %s195
      %p204 = scmp.eq.s32.totalorder %s25, 1
      %p205 = por %p203, %p204
      %p206 = scmp.ne.s32.totalorder %s195, %s196
      %p207 = scmp.eq.s32.totalorder %s25, 0
      %p208 = por %p206, %p207
      %p209 = scmp.ne.s32.totalorder %s195, %s196
      %p210 = scmp.eq.s32.totalorder %s26, 1
      %p211 = por %p209, %p210
      %p213 = scmp.ne.s32.totalorder %s196, %s212
      %p214 = scmp.eq.s32.totalorder %s26, 0
      %p215 = por %p213, %p214
      %p216 = scmp.le.s32.totalorder 1, %s20
      %p217 = scmp.lt.s32.totalorder %s20, 3
      %p218 = pnand %p216, %p217
      %p219 = pneg %p218
      // Predicated region
      $region9: #{tpu_custom_call.1} parent=5 // pred_check
        _
      $region10: #{tpu_custom_call.1} parent=5 // pred_check_branch
        %221 = sbr.rel (%p218) target = $region12
      $region11: #{tpu_custom_call.1} parent=5 // pred_region
        %s222 = ssub.s32 %s20, 1
        // Predicated region
        $region13: #{tpu_custom_call.1} parent=11 // pred_check
          %p223 = pneg %p93
        $region14: #{tpu_custom_call.1} parent=11 // pred_check_branch
          %225 = sbr.rel (%p223) target = $region16
        $region15: #{tpu_custom_call.1} parent=11 // pred_region
          _
        $region16: #{tpu_custom_call.1} parent=11 // pred_fallthru
          _
        // Predicated region
        $region17: #{tpu_custom_call.1} parent=11 // pred_check
          %p226 = pneg %p114
        $region18: #{tpu_custom_call.1} parent=11 // pred_check_branch
          %228 = sbr.rel (%p226) target = $region20
        $region19: #{tpu_custom_call.1} parent=11 // pred_region
          _
        $region20: #{tpu_custom_call.1} parent=11 // pred_fallthru
          _
        // Predicated region
        $region21: #{tpu_custom_call.1} parent=11 // pred_check
          %p229 = pneg %p135
        $region22: #{tpu_custom_call.1} parent=11 // pred_check_branch
          %231 = sbr.rel (%p229) target = $region24
        $region23: #{tpu_custom_call.1} parent=11 // pred_region
          _
        $region24: #{tpu_custom_call.1} parent=11 // pred_fallthru
          _
        // Predicated region
        $region25: #{tpu_custom_call.1} parent=11 // pred_check
          %p232 = pneg %p156
        $region26: #{tpu_custom_call.1} parent=11 // pred_check_branch
          %234 = sbr.rel (%p232) target = $region28
        $region27: #{tpu_custom_call.1} parent=11 // pred_region
          _
        $region28: #{tpu_custom_call.1} parent=11 // pred_fallthru
          _
      $region12: #{tpu_custom_call.1} parent=5 // pred_fallthru
        _
      %p235 = scmp.lt.s32.totalorder %s20, 2
      // Predicated region
      $region29: #{tpu_custom_call.1} parent=5 // pred_check
        %p236 = pneg %p235
      $region30: #{tpu_custom_call.1} parent=5 // pred_check_branch
        %238 = sbr.rel (%p236) target = $region32
      $region31: #{tpu_custom_call.1} parent=5 // pred_region
        // Predicated region
        $region33: #{tpu_custom_call.1} parent=31 // pred_check
          %p239 = pneg %p40
        $region34: #{tpu_custom_call.1} parent=31 // pred_check_branch
          %241 = sbr.rel (%p239) target = $region36
        $region35: #{tpu_custom_call.1} parent=31 // pred_region
          %p242 = scmp.lt.s32.totalorder %s20, 1
          %s243 = scalar_select %p242, %s20, 1
          %s244 = smul.addr %s243, 2
          %s245 = smul.addr %s244, 4
          %s246 = scalar_lea.vmem %s0, %s245
        $region36: #{tpu_custom_call.1} parent=31 // pred_fallthru
          _
        // Predicated region
        $region37: #{tpu_custom_call.1} parent=31 // pred_check
          %p247 = pneg %p66
        $region38: #{tpu_custom_call.1} parent=31 // pred_check_branch
          %249 = sbr.rel (%p247) target = $region40
        $region39: #{tpu_custom_call.1} parent=31 // pred_region
          %p250 = scmp.lt.s32.totalorder %s20, 1
          %s251 = scalar_select %p250, %s20, 1
          %s252 = smul.addr %s251, 2
          %s253 = smul.addr %s252, 4
          %s254 = scalar_lea.vmem %s1, %s253
        $region40: #{tpu_custom_call.1} parent=31 // pred_fallthru
          _
      $region32: #{tpu_custom_call.1} parent=5 // pred_fallthru
        _
      %p255 = scmp.le.s32.totalorder 1, %s20
      %p256 = scmp.lt.s32.totalorder %s20, 3
      %p257 = pnand %p255, %p256
      %p258 = pneg %p257
      // Predicated region
      $region41: #{tpu_custom_call.1} parent=5 // pred_check
        _
      $region42: #{tpu_custom_call.1} parent=5 // pred_check_branch
        %260 = sbr.rel (%p257) target = $region44
      $region43: #{tpu_custom_call.1} parent=5 // pred_region
        %s261 = ssub.s32 %s20, 1
        %p262 = scmp.lt.s32.totalorder %s25, 1
        %s263 = scalar_select %p262, %s25, 1
        %s264 = smul.addr %s263, 2
        %s265 = smul.addr %s264, 4
        %s266 = scalar_lea.vmem %s0, %s265
        %p267 = pneg %p46
        %p268 = pneg %p43
        %p269 = scmp.lt.s32.totalorder %s25, 1
        %s270 = scalar_select %p269, %s25, 1
        %s271 = smul.addr %s270, 2
        %s272 = smul.addr %s271, 4
        %s273 = scalar_lea.vmem %s1, %s272
        %p274 = pneg %p72
        %p275 = pneg %p69
        %p276 = pneg %p93
        %p277 = pneg %p90
        %p278 = pneg %p114
        %p279 = pneg %p111
        %p280 = pneg %p135
        %p281 = pneg %p132
        %p282 = pneg %p156
        %p283 = pneg %p153
        %p284 = pneg %p182
        %p285 = pneg %p179
        %s286 = sand.u32 %s169, 1
        %s287 = scalar_lea.sflag [#allocation3], %s286
        %s288 = sand.u32 %s169, 1
        %s289 = smul.addr %s288, 8
        %s290 = scalar_lea.vmem [#allocation2], %s289
        %p291 = pneg %p208
        %p292 = pneg %p205
        %s293 = sand.u32 %s195, 1
        %s294 = scalar_lea.sflag [#allocation5], %s293
        %s295 = sand.u32 %s195, 1
        %s296 = smul.addr %s295, 8
        %s297 = scalar_lea.vmem [#allocation4], %s296
        %p298 = scmp.lt.s32.totalorder %s25, 1
        %s299 = scalar_select %p298, %s25, 1
        %s300 = smul.addr %s299, 2
        %s301 = smul.addr %s300, 4
        %s302 = scalar_lea.vmem %s0, %s301
        %p303 = scmp.lt.s32.totalorder %s25, 1
        %s304 = scalar_select %p303, %s25, 1
        %s305 = smul.addr %s304, 2
        %s306 = smul.addr %s305, 4
        %s307 = scalar_lea.vmem %s1, %s306
        %v308 = vld [vmem:[%s302] sm:$0xff]
        %v309 = vld [vmem:[%s307] sm:$0xff]
        %v311 = vcombine.high %v308, %v308
        %v313 = vcombine.high %v309, %v309
        %v314 = vld [vmem:[%s2] sm:$0x3f]
        %v315 = vld [vmem:[%s3] sm:$0x3f]
        %317 = vset.pattern.permute.xlu0 0
        %318 = vperm.xlu0 %317, %v315
        %v319 = vpop.permute.xlu0 %318
        %vm321 = vcmask 31744
        %v323 = vsel %vm321, %v314, 0
        %vm325 = vcmask 1043456
        %v326 = vsel %vm325, %v308, 0
        %v328 = vsel %vm325, %v311, 0
        %v330 = vsel %vm325, %v309, 0
        %v332 = vsel %vm325, %v313, 0
        %334 = vmatprep.subr.mxu0 0.0
        %335 = vmatpush1.msra.mxu0 0.0
        %336 = vmatprep.subr.mxu0 0.0
        %337 = vmatpush1.msra.mxu0 0.0
        %338 = vmatprep.subr.mxu0 0.0
        %339 = vmatpush1.msra.mxu0 0.0
        %340 = vmatprep.subr.mxu0 0.0
        %341 = vmatpush1.msra.mxu0 0.0
        %342 = vmatprep.subr.mxu0 0.0
        %343 = vmatpush1.msra.mxu0 0.0
        %344 = vmatprep.subr.mxu0 0.0
        %345 = vmatpush1.msra.mxu0 0.0
        %346 = vmatprep.subr.mxu0 0.0
        %347 = vmatpush1.msra.mxu0 0.0
        %348 = vmatprep.subr.mxu0 0.0
        %349 = vmatpush1.msra.mxu0 0.0
        %350 = vmatprep.subr.mxu0 0.0
        %351 = vmatpush1.msra.mxu0 0.0
        %352 = vmatprep.subr.mxu0 0.0
        %353 = vmatpush1.msra.mxu0 0.0
        %354 = vmatprep.subr.mxu0 0.0
        %355 = vmatpush1.msra.mxu0 0.0
        %356 = vmatprep.subr.mxu0 0.0
        %357 = vmatpush1.msra.mxu0 0.0
        %358 = vmatprep.subr.mxu0 0.0
        %359 = vmatpush1.msra.mxu0 0.0
        %360 = vmatprep.subr.mxu0 0.0
        %361 = vmatpush1.msra.mxu0 0.0
        %362 = vmatprep.subr.mxu0 0.0
        %363 = vmatpush1.msra.mxu0 0.0
        %364 = vmatprep.subr.mxu0 %v328
        %365 = vmatpush1.msra.mxu0 %v326
        %366 = vmatprep.subr.mxu0 0.0
        %367 = vmatpush2.msra.mxu0 0.0
        %368 = vmatprep.subr.mxu0 0.0
        %369 = vmatpush2.msra.mxu0 0.0
        %370 = vmatprep.subr.mxu0 0.0
        %371 = vmatpush2.msra.mxu0 0.0
        %372 = vmatprep.subr.mxu0 0.0
        %373 = vmatpush2.msra.mxu0 0.0
        %374 = vmatprep.subr.mxu0 0.0
        %375 = vmatpush2.msra.mxu0 0.0
        %376 = vmatprep.subr.mxu0 0.0
        %377 = vmatpush2.msra.mxu0 0.0
        %378 = vmatprep.subr.mxu0 0.0
        %379 = vmatpush2.msra.mxu0 0.0
        %380 = vmatprep.subr.mxu0 0.0
        %381 = vmatpush2.msra.mxu0 0.0
        %382 = vmatprep.subr.mxu0 0.0
        %383 = vmatpush2.msra.mxu0 0.0
        %384 = vmatprep.subr.mxu0 0.0
        %385 = vmatpush2.msra.mxu0 0.0
        %386 = vmatprep.subr.mxu0 0.0
        %387 = vmatpush2.msra.mxu0 0.0
        %388 = vmatprep.subr.mxu0 0.0
        %389 = vmatpush2.msra.mxu0 0.0
        %390 = vmatprep.subr.mxu0 0.0
        %391 = vmatpush2.msra.mxu0 0.0
        %392 = vmatprep.subr.mxu0 0.0
        %393 = vmatpush2.msra.mxu0 0.0
        %394 = vmatprep.subr.mxu0 0.0
        %395 = vmatpush2.msra.mxu0 0.0
        %396 = vmatprep.subr.mxu0 0.0
        %397 = vmatpush2.msra.mxu0 0.0
        %398 = vmatprep.mubr.f32.mxu0 0.0
        %399 = vmatmul.mubr.f32.gmra.mxu0 %v323
        %v400 = vpop.f32.mrf.mxu0
        %v401 = vadd.f32 %v319, %v400
        %v402 = vpop.f32.mrf.mxu0
        %v403 = vadd.f32 %v319, %v402
        %404 = vdwg.mxu0
        %405 = vmatprep.subr.mxu0 0.0
        %406 = vmatpush1.msra.mxu0 0.0
        %407 = vmatprep.subr.mxu0 0.0
        %408 = vmatpush1.msra.mxu0 0.0
        %409 = vmatprep.subr.mxu0 0.0
        %410 = vmatpush1.msra.mxu0 0.0
        %411 = vmatprep.subr.mxu0 0.0
        %412 = vmatpush1.msra.mxu0 0.0
        %413 = vmatprep.subr.mxu0 0.0
        %414 = vmatpush1.msra.mxu0 0.0
        %415 = vmatprep.subr.mxu0 0.0
        %416 = vmatpush1.msra.mxu0 0.0
        %417 = vmatprep.subr.mxu0 0.0
        %418 = vmatpush1.msra.mxu0 0.0
        %419 = vmatprep.subr.mxu0 0.0
        %420 = vmatpush1.msra.mxu0 0.0
        %421 = vmatprep.subr.mxu0 0.0
        %422 = vmatpush1.msra.mxu0 0.0
        %423 = vmatprep.subr.mxu0 0.0
        %424 = vmatpush1.msra.mxu0 0.0
        %425 = vmatprep.subr.mxu0 0.0
        %426 = vmatpush1.msra.mxu0 0.0
        %427 = vmatprep.subr.mxu0 0.0
        %428 = vmatpush1.msra.mxu0 0.0
        %429 = vmatprep.subr.mxu0 0.0
        %430 = vmatpush1.msra.mxu0 0.0
        %431 = vmatprep.subr.mxu0 0.0
        %432 = vmatpush1.msra.mxu0 0.0
        %433 = vmatprep.subr.mxu0 0.0
        %434 = vmatpush1.msra.mxu0 0.0
        %435 = vmatprep.subr.mxu0 %v332
        %436 = vmatpush1.msra.mxu0 %v330
        %437 = vmatprep.subr.mxu0 0.0
        %438 = vmatpush2.msra.mxu0 0.0
        %439 = vmatprep.subr.mxu0 0.0
        %440 = vmatpush2.msra.mxu0 0.0
        %441 = vmatprep.subr.mxu0 0.0
        %442 = vmatpush2.msra.mxu0 0.0
        %443 = vmatprep.subr.mxu0 0.0
        %444 = vmatpush2.msra.mxu0 0.0
        %445 = vmatprep.subr.mxu0 0.0
        %446 = vmatpush2.msra.mxu0 0.0
        %447 = vmatprep.subr.mxu0 0.0
        %448 = vmatpush2.msra.mxu0 0.0
        %449 = vmatprep.subr.mxu0 0.0
        %450 = vmatpush2.msra.mxu0 0.0
        %451 = vmatprep.subr.mxu0 0.0
        %452 = vmatpush2.msra.mxu0 0.0
        %453 = vmatprep.subr.mxu0 0.0
        %454 = vmatpush2.msra.mxu0 0.0
        %455 = vmatprep.subr.mxu0 0.0
        %456 = vmatpush2.msra.mxu0 0.0
        %457 = vmatprep.subr.mxu0 0.0
        %458 = vmatpush2.msra.mxu0 0.0
        %459 = vmatprep.subr.mxu0 0.0
        %460 = vmatpush2.msra.mxu0 0.0
        %461 = vmatprep.subr.mxu0 0.0
        %462 = vmatpush2.msra.mxu0 0.0
        %463 = vmatprep.subr.mxu0 0.0
        %464 = vmatpush2.msra.mxu0 0.0
        %465 = vmatprep.subr.mxu0 0.0
        %466 = vmatpush2.msra.mxu0 0.0
        %467 = vmatprep.subr.mxu0 0.0
        %468 = vmatpush2.msra.mxu0 0.0
        %469 = vmatprep.mubr.f32.mxu0 0.0
        %470 = vmatmul.mubr.f32.gmra.mxu0 %v323
        %v471 = vpop.f32.mrf.mxu0
        %v472 = vadd.f32 %v319, %v471
        %v473 = vpop.f32.mrf.mxu0
        %v474 = vadd.f32 %v319, %v473
        %475 = vdwg.mxu0
        %v478 = vrot.slane %v401, 2
        %v479 = vrot.slane %v403, 2
        %v484 = vrot.slane %v472, 4
        %v485 = vrot.slane %v474, 4
        %488 = vmatprep.subr.mxu0 0.0
        %489 = vmatpush1.xpose.msra.mxu0 0.0
        %490 = vmatprep.subr.mxu0 0.0
        %491 = vmatpush1.xpose.msra.mxu0 0.0
        %492 = vmatprep.subr.mxu0 0.0
        %493 = vmatpush1.xpose.msra.mxu0 0.0
        %494 = vmatprep.subr.mxu0 0.0
        %495 = vmatpush1.xpose.msra.mxu0 0.0
        %496 = vmatprep.subr.mxu0 0.0
        %497 = vmatpush1.xpose.msra.mxu0 0.0
        %498 = vmatprep.subr.mxu0 0.0
        %499 = vmatpush1.xpose.msra.mxu0 0.0
        %500 = vmatprep.subr.mxu0 0.0
        %501 = vmatpush1.xpose.msra.mxu0 0.0
        %502 = vmatprep.subr.mxu0 0.0
        %503 = vmatpush1.xpose.msra.mxu0 0.0
        %504 = vmatprep.subr.mxu0 0.0
        %505 = vmatpush1.xpose.msra.mxu0 0.0
        %506 = vmatprep.subr.mxu0 0.0
        %507 = vmatpush1.xpose.msra.mxu0 0.0
        %508 = vmatprep.subr.mxu0 0.0
        %509 = vmatpush1.xpose.msra.mxu0 0.0
        %510 = vmatprep.subr.mxu0 0.0
        %511 = vmatpush1.xpose.msra.mxu0 0.0
        %512 = vmatprep.subr.mxu0 0.0
        %513 = vmatpush1.xpose.msra.mxu0 0.0
        %514 = vmatprep.subr.mxu0 0.0
        %515 = vmatpush1.xpose.msra.mxu0 0.0
        %516 = vmatprep.subr.mxu0 0.0
        %517 = vmatpush1.xpose.msra.mxu0 0.0
        %518 = vmatprep.subr.mxu0 %v485
        %519 = vmatpush1.xpose.msra.mxu0 %v484
        %520 = vmatprep.subr.mxu0 0.0
        %521 = vmatpush2.xpose.msra.mxu0 0.0
        %522 = vmatprep.subr.mxu0 0.0
        %523 = vmatpush2.xpose.msra.mxu0 0.0
        %524 = vmatprep.subr.mxu0 0.0
        %525 = vmatpush2.xpose.msra.mxu0 0.0
        %526 = vmatprep.subr.mxu0 0.0
        %527 = vmatpush2.xpose.msra.mxu0 0.0
        %528 = vmatprep.subr.mxu0 0.0
        %529 = vmatpush2.xpose.msra.mxu0 0.0
        %530 = vmatprep.subr.mxu0 0.0
        %531 = vmatpush2.xpose.msra.mxu0 0.0
        %532 = vmatprep.subr.mxu0 0.0
        %533 = vmatpush2.xpose.msra.mxu0 0.0
        %534 = vmatprep.subr.mxu0 0.0
        %535 = vmatpush2.xpose.msra.mxu0 0.0
        %536 = vmatprep.subr.mxu0 0.0
        %537 = vmatpush2.xpose.msra.mxu0 0.0
        %538 = vmatprep.subr.mxu0 0.0
        %539 = vmatpush2.xpose.msra.mxu0 0.0
        %540 = vmatprep.subr.mxu0 0.0
        %541 = vmatpush2.xpose.msra.mxu0 0.0
        %542 = vmatprep.subr.mxu0 0.0
        %543 = vmatpush2.xpose.msra.mxu0 0.0
        %544 = vmatprep.subr.mxu0 0.0
        %545 = vmatpush2.xpose.msra.mxu0 0.0
        %546 = vmatprep.subr.mxu0 0.0
        %547 = vmatpush2.xpose.msra.mxu0 0.0
        %548 = vmatprep.subr.mxu0 0.0
        %549 = vmatpush2.xpose.msra.mxu0 0.0
        %550 = vmatprep.subr.mxu0 0.0
        %551 = vmatpush2.xpose.msra.mxu0 0.0
        %552 = vmatprep.mubr.f32.mxu0 %v479
        %553 = vmatmul.mubr.f32.gmra.mxu0 %v478
        %v554 = vpop.f32.mrf.mxu0
        %v555 = vadd.f32 0.0, %v554
        %v556 = vpop.f32.mrf.mxu0
        %557 = vdwg.mxu0
        %vm558 = vcmask 9216
        %v559 = vsel %vm558, %v555, -inf
        %560 = vmax.xlane.f32.xlu0 %v559
        %v561 = vpop.xlane.xlu0 %560
        %v562 = vsub.f32 %v555, %v561
        %v563 = vmul.f32 %v562, 1.442695
        %v564 = vpow.pop %v563
        %v565 = vsel %vm558, %v564, 0.0
        %566 = vadd.xlane.f32.xlu0 %v565
        %v567 = vpop.xlane.xlu0 %566
        %v568 = vrcp.pop %v567
        %v569 = vmul.f32 %v564, %v568
        %v570 = vrot.slane %v559, 4
        %v571 = vmax.f32 %v559, %v570
        %v572 = vrot.slane %v571, 2
        %v573 = vmax.f32 %v571, %v572
        %v574 = vrot.slane %v573, 1
        %v575 = vmax.f32 %v573, %v574
        %v576 = vsub.f32 %v555, %v575
        %v577 = vmul.f32 %v576, 1.442695
        %v578 = vpow.pop %v577
        %v579 = vsel %vm558, %v578, 0.0
        %v580 = vrot.slane %v579, 4
        %v581 = vadd.f32 %v579, %v580
        %v582 = vrot.slane %v581, 2
        %v583 = vadd.f32 %v581, %v582
        %v584 = vrot.slane %v583, 1
        %v585 = vadd.f32 %v583, %v584
        %v586 = vrcp.pop %v585
        %v587 = vmul.f32 %v578, %v586
        %588 = vxpose.xlu0.b32.start [1/16] %v478, 128
        %589 = vxpose.xlu0.b32.cont [2/16] 0.0, 128
        %590 = vxpose.xlu0.b32.cont [3/16] 0.0, 128
        %591 = vxpose.xlu0.b32.cont [4/16] 0.0, 128
        %592 = vxpose.xlu0.b32.cont [5/16] 0.0, 128
        %593 = vxpose.xlu0.b32.cont [6/16] 0.0, 128
        %594 = vxpose.xlu0.b32.cont [7/16] 0.0, 128
        %595 = vxpose.xlu0.b32.cont [8/16] 0.0, 128
        %596 = vxpose.xlu0.b32.cont [9/16] 0.0, 128
        %597 = vxpose.xlu0.b32.cont [10/16] 0.0, 128
        %598 = vxpose.xlu0.b32.cont [11/16] 0.0, 128
        %599 = vxpose.xlu0.b32.cont [12/16] 0.0, 128
        %600 = vxpose.xlu0.b32.cont [13/16] 0.0, 128
        %601 = vxpose.xlu0.b32.cont [14/16] 0.0, 128
        %602 = vxpose.xlu0.b32.cont [15/16] 0.0, 128
        %603 = vxpose.xlu0.b32.end [16/16] 0.0, 128
        %v604 = vpop.trf.xlu0
        %v605 = vpop.trf.xlu0
        %v606 = vpop.trf.xlu0
        %v607 = vpop.trf.xlu0
        %v608 = vpop.trf.xlu0
        %v609 = vpop.trf.xlu0
        %v610 = vpop.trf.xlu0
        %v611 = vpop.trf.xlu0
        %v612 = vpop.trf.xlu0
        %v613 = vpop.trf.xlu0
        %v614 = vpop.trf.xlu0
        %v615 = vpop.trf.xlu0
        %v616 = vpop.trf.xlu0
        %v617 = vpop.trf.xlu0
        %v618 = vpop.trf.xlu0
        %v619 = vpop.trf.xlu0
        %620 = vxpose.xlu0.b32.start [1/16] %v479, 128
        %621 = vxpose.xlu0.b32.cont [2/16] 0.0, 128
        %622 = vxpose.xlu0.b32.cont [3/16] 0.0, 128
        %623 = vxpose.xlu0.b32.cont [4/16] 0.0, 128
        %624 = vxpose.xlu0.b32.cont [5/16] 0.0, 128
        %625 = vxpose.xlu0.b32.cont [6/16] 0.0, 128
        %626 = vxpose.xlu0.b32.cont [7/16] 0.0, 128
        %627 = vxpose.xlu0.b32.cont [8/16] 0.0, 128
        %628 = vxpose.xlu0.b32.cont [9/16] 0.0, 128
        %629 = vxpose.xlu0.b32.cont [10/16] 0.0, 128
        %630 = vxpose.xlu0.b32.cont [11/16] 0.0, 128
        %631 = vxpose.xlu0.b32.cont [12/16] 0.0, 128
        %632 = vxpose.xlu0.b32.cont [13/16] 0.0, 128
        %633 = vxpose.xlu0.b32.cont [14/16] 0.0, 128
        %634 = vxpose.xlu0.b32.cont [15/16] 0.0, 128
        %635 = vxpose.xlu0.b32.end [16/16] 0.0, 128
        %v636 = vpop.trf.xlu0
        %v637 = vpop.trf.xlu0
        %v638 = vpop.trf.xlu0
        %v639 = vpop.trf.xlu0
        %v640 = vpop.trf.xlu0
        %v641 = vpop.trf.xlu0
        %v642 = vpop.trf.xlu0
        %v643 = vpop.trf.xlu0
        %v644 = vpop.trf.xlu0
        %v645 = vpop.trf.xlu0
        %v646 = vpop.trf.xlu0
        %v647 = vpop.trf.xlu0
        %v648 = vpop.trf.xlu0
        %v649 = vpop.trf.xlu0
        %v650 = vpop.trf.xlu0
        %v651 = vpop.trf.xlu0
        %vm652 = vcmask 15360
        %v654 = vsel %vm652, %v604, 0
        %v657 = vsel %vm652, %v605, 0
        %v660 = vsel %vm652, %v606, 0
        %v663 = vsel %vm652, %v607, 0
        %v666 = vsel %vm652, %v608, 0
        %v669 = vsel %vm652, %v609, 0
        %v672 = vsel %vm652, %v610, 0
        %v675 = vsel %vm652, %v611, 0
        %v678 = vsel %vm652, %v612, 0
        %v681 = vsel %vm652, %v613, 0
        %v684 = vsel %vm652, %v614, 0
        %v687 = vsel %vm652, %v615, 0
        %v690 = vsel %vm652, %v616, 0
        %v693 = vsel %vm652, %v617, 0
        %v696 = vsel %vm652, %v618, 0
        %v699 = vsel %vm652, %v619, 0
        %v702 = vsel %vm652, %v636, 0
        %v705 = vsel %vm652, %v637, 0
        %v708 = vsel %vm652, %v638, 0
        %v711 = vsel %vm652, %v639, 0
        %v714 = vsel %vm652, %v640, 0
        %v717 = vsel %vm652, %v641, 0
        %v720 = vsel %vm652, %v642, 0
        %v723 = vsel %vm652, %v643, 0
        %v726 = vsel %vm652, %v644, 0
        %v729 = vsel %vm652, %v645, 0
        %v732 = vsel %vm652, %v646, 0
        %v735 = vsel %vm652, %v647, 0
        %v738 = vsel %vm652, %v648, 0
        %v741 = vsel %vm652, %v649, 0
        %v744 = vsel %vm652, %v650, 0
        %v747 = vsel %vm652, %v651, 0
        %vm749 = vcmask 1041408
        %v750 = vsel %vm749, %v484, 0
        %v752 = vsel %vm749, %v485, 0
        %754 = vmatprep.subr.mxu0 0.0
        %755 = vmatpush1.msra.mxu0 0.0
        %756 = vmatprep.subr.mxu0 0.0
        %757 = vmatpush1.msra.mxu0 0.0
        %758 = vmatprep.subr.mxu0 0.0
        %759 = vmatpush1.msra.mxu0 0.0
        %760 = vmatprep.subr.mxu0 0.0
        %761 = vmatpush1.msra.mxu0 0.0
        %762 = vmatprep.subr.mxu0 0.0
        %763 = vmatpush1.msra.mxu0 0.0
        %764 = vmatprep.subr.mxu0 0.0
        %765 = vmatpush1.msra.mxu0 0.0
        %766 = vmatprep.subr.mxu0 0.0
        %767 = vmatpush1.msra.mxu0 0.0
        %768 = vmatprep.subr.mxu0 0.0
        %769 = vmatpush1.msra.mxu0 0.0
        %770 = vmatprep.subr.mxu0 0.0
        %771 = vmatpush1.msra.mxu0 0.0
        %772 = vmatprep.subr.mxu0 0.0
        %773 = vmatpush1.msra.mxu0 0.0
        %774 = vmatprep.subr.mxu0 0.0
        %775 = vmatpush1.msra.mxu0 0.0
        %776 = vmatprep.subr.mxu0 0.0
        %777 = vmatpush1.msra.mxu0 0.0
        %778 = vmatprep.subr.mxu0 0.0
        %779 = vmatpush1.msra.mxu0 0.0
        %780 = vmatprep.subr.mxu0 0.0
        %781 = vmatpush1.msra.mxu0 0.0
        %782 = vmatprep.subr.mxu0 0.0
        %783 = vmatpush1.msra.mxu0 0.0
        %784 = vmatprep.subr.mxu0 %v752
        %785 = vmatpush1.msra.mxu0 %v750
        %786 = vmatprep.subr.mxu0 0.0
        %787 = vmatpush2.msra.mxu0 0.0
        %788 = vmatprep.subr.mxu0 0.0
        %789 = vmatpush2.msra.mxu0 0.0
        %790 = vmatprep.subr.mxu0 0.0
        %791 = vmatpush2.msra.mxu0 0.0
        %792 = vmatprep.subr.mxu0 0.0
        %793 = vmatpush2.msra.mxu0 0.0
        %794 = vmatprep.subr.mxu0 0.0
        %795 = vmatpush2.msra.mxu0 0.0
        %796 = vmatprep.subr.mxu0 0.0
        %797 = vmatpush2.msra.mxu0 0.0
        %798 = vmatprep.subr.mxu0 0.0
        %799 = vmatpush2.msra.mxu0 0.0
        %800 = vmatprep.subr.mxu0 0.0
        %801 = vmatpush2.msra.mxu0 0.0
        %802 = vmatprep.subr.mxu0 0.0
        %803 = vmatpush2.msra.mxu0 0.0
        %804 = vmatprep.subr.mxu0 0.0
        %805 = vmatpush2.msra.mxu0 0.0
        %806 = vmatprep.subr.mxu0 0.0
        %807 = vmatpush2.msra.mxu0 0.0
        %808 = vmatprep.subr.mxu0 0.0
        %809 = vmatpush2.msra.mxu0 0.0
        %810 = vmatprep.subr.mxu0 0.0
        %811 = vmatpush2.msra.mxu0 0.0
        %812 = vmatprep.subr.mxu0 0.0
        %813 = vmatpush2.msra.mxu0 0.0
        %814 = vmatprep.subr.mxu0 0.0
        %815 = vmatpush2.msra.mxu0 0.0
        %816 = vmatprep.subr.mxu0 0.0
        %817 = vmatpush2.msra.mxu0 0.0
        %818 = vmatprep.mubr.f32.mxu0 0.0
        %819 = vmatmul.mubr.f32.gmra.mxu0 %v654
        %v820 = vpop.f32.mrf.mxu0
        %v821 = vadd.f32 0.0, %v820
        %v822 = vpop.f32.mrf.mxu0
        %v823 = vadd.f32 0.0, %v822
        %824 = vmatprep.mubr.f32.mxu0 0.0
        %825 = vmatmul.mubr.f32.gmra.mxu0 %v657
        %v826 = vpop.f32.mrf.mxu0
        %v827 = vadd.f32 0.0, %v826
        %v828 = vpop.f32.mrf.mxu0
        %v829 = vadd.f32 0.0, %v828
        %830 = vmatprep.mubr.f32.mxu0 0.0
        %831 = vmatmul.mubr.f32.gmra.mxu0 %v660
        %v832 = vpop.f32.mrf.mxu0
        %v833 = vadd.f32 0.0, %v832
        %v834 = vpop.f32.mrf.mxu0
        %v835 = vadd.f32 0.0, %v834
        %836 = vmatprep.mubr.f32.mxu0 0.0
        %837 = vmatmul.mubr.f32.gmra.mxu0 %v663
        %v838 = vpop.f32.mrf.mxu0
        %v839 = vadd.f32 0.0, %v838
        %v840 = vpop.f32.mrf.mxu0
        %v841 = vadd.f32 0.0, %v840
        %842 = vmatprep.mubr.f32.mxu0 0.0
        %843 = vmatmul.mubr.f32.gmra.mxu0 %v666
        %v844 = vpop.f32.mrf.mxu0
        %v845 = vadd.f32 0.0, %v844
        %v846 = vpop.f32.mrf.mxu0
        %v847 = vadd.f32 0.0, %v846
        %848 = vmatprep.mubr.f32.mxu0 0.0
        %849 = vmatmul.mubr.f32.gmra.mxu0 %v669
        %v850 = vpop.f32.mrf.mxu0
        %v851 = vadd.f32 0.0, %v850
        %v852 = vpop.f32.mrf.mxu0
        %v853 = vadd.f32 0.0, %v852
        %854 = vmatprep.mubr.f32.mxu0 0.0
        %855 = vmatmul.mubr.f32.gmra.mxu0 %v672
        %v856 = vpop.f32.mrf.mxu0
        %v857 = vadd.f32 0.0, %v856
        %v858 = vpop.f32.mrf.mxu0
        %v859 = vadd.f32 0.0, %v858
        %860 = vmatprep.mubr.f32.mxu0 0.0
        %861 = vmatmul.mubr.f32.gmra.mxu0 %v675
        %v862 = vpop.f32.mrf.mxu0
        %v863 = vadd.f32 0.0, %v862
        %v864 = vpop.f32.mrf.mxu0
        %v865 = vadd.f32 0.0, %v864
        %866 = vmatprep.mubr.f32.mxu0 0.0
        %867 = vmatmul.mubr.f32.gmra.mxu0 %v678
        %v868 = vpop.f32.mrf.mxu0
        %v869 = vadd.f32 0.0, %v868
        %v870 = vpop.f32.mrf.mxu0
        %v871 = vadd.f32 0.0, %v870
        %872 = vmatprep.mubr.f32.mxu0 0.0
        %873 = vmatmul.mubr.f32.gmra.mxu0 %v681
        %v874 = vpop.f32.mrf.mxu0
        %v875 = vadd.f32 0.0, %v874
        %v876 = vpop.f32.mrf.mxu0
        %v877 = vadd.f32 0.0, %v876
        %878 = vmatprep.mubr.f32.mxu0 0.0
        %879 = vmatmul.mubr.f32.gmra.mxu0 %v684
        %v880 = vpop.f32.mrf.mxu0
        %v881 = vadd.f32 0.0, %v880
        %v882 = vpop.f32.mrf.mxu0
        %v883 = vadd.f32 0.0, %v882
        %884 = vmatprep.mubr.f32.mxu0 0.0
        %885 = vmatmul.mubr.f32.gmra.mxu0 %v687
        %v886 = vpop.f32.mrf.mxu0
        %v887 = vadd.f32 0.0, %v886
        %v888 = vpop.f32.mrf.mxu0
        %v889 = vadd.f32 0.0, %v888
        %890 = vmatprep.mubr.f32.mxu0 0.0
        %891 = vmatmul.mubr.f32.gmra.mxu0 %v690
        %v892 = vpop.f32.mrf.mxu0
        %v893 = vadd.f32 0.0, %v892
        %v894 = vpop.f32.mrf.mxu0
        %v895 = vadd.f32 0.0, %v894
        %896 = vmatprep.mubr.f32.mxu0 0.0
        %897 = vmatmul.mubr.f32.gmra.mxu0 %v693
        %v898 = vpop.f32.mrf.mxu0
        %v899 = vadd.f32 0.0, %v898
        %v900 = vpop.f32.mrf.mxu0
        %v901 = vadd.f32 0.0, %v900
        %902 = vmatprep.mubr.f32.mxu0 0.0
        %903 = vmatmul.mubr.f32.gmra.mxu0 %v696
        %v904 = vpop.f32.mrf.mxu0
        %v905 = vadd.f32 0.0, %v904
        %v906 = vpop.f32.mrf.mxu0
        %v907 = vadd.f32 0.0, %v906
        %908 = vmatprep.mubr.f32.mxu0 0.0
        %909 = vmatmul.mubr.f32.gmra.mxu0 %v699
        %v910 = vpop.f32.mrf.mxu0
        %v911 = vadd.f32 0.0, %v910
        %v912 = vpop.f32.mrf.mxu0
        %v913 = vadd.f32 0.0, %v912
        %914 = vmatprep.mubr.f32.mxu0 0.0
        %915 = vmatmul.mubr.f32.gmra.mxu0 %v702
        %v916 = vpop.f32.mrf.mxu0
        %v917 = vadd.f32 0.0, %v916
        %v918 = vpop.f32.mrf.mxu0
        %v919 = vadd.f32 0.0, %v918
        %920 = vmatprep.mubr.f32.mxu0 0.0
        %921 = vmatmul.mubr.f32.gmra.mxu0 %v705
        %v922 = vpop.f32.mrf.mxu0
        %v923 = vadd.f32 0.0, %v922
        %v924 = vpop.f32.mrf.mxu0
        %v925 = vadd.f32 0.0, %v924
        %926 = vmatprep.mubr.f32.mxu0 0.0
        %927 = vmatmul.mubr.f32.gmra.mxu0 %v708
        %v928 = vpop.f32.mrf.mxu0
        %v929 = vadd.f32 0.0, %v928
        %v930 = vpop.f32.mrf.mxu0
        %v931 = vadd.f32 0.0, %v930
        %932 = vmatprep.mubr.f32.mxu0 0.0
        %933 = vmatmul.mubr.f32.gmra.mxu0 %v711
        %v934 = vpop.f32.mrf.mxu0
        %v935 = vadd.f32 0.0, %v934
        %v936 = vpop.f32.mrf.mxu0
        %v937 = vadd.f32 0.0, %v936
        %938 = vmatprep.mubr.f32.mxu0 0.0
        %939 = vmatmul.mubr.f32.gmra.mxu0 %v714
        %v940 = vpop.f32.mrf.mxu0
        %v941 = vadd.f32 0.0, %v940
        %v942 = vpop.f32.mrf.mxu0
        %v943 = vadd.f32 0.0, %v942
        %944 = vmatprep.mubr.f32.mxu0 0.0
        %945 = vmatmul.mubr.f32.gmra.mxu0 %v717
        %v946 = vpop.f32.mrf.mxu0
        %v947 = vadd.f32 0.0, %v946
        %v948 = vpop.f32.mrf.mxu0
        %v949 = vadd.f32 0.0, %v948
        %950 = vmatprep.mubr.f32.mxu0 0.0
        %951 = vmatmul.mubr.f32.gmra.mxu0 %v720
        %v952 = vpop.f32.mrf.mxu0
        %v953 = vadd.f32 0.0, %v952
        %v954 = vpop.f32.mrf.mxu0
        %v955 = vadd.f32 0.0, %v954
        %956 = vmatprep.mubr.f32.mxu0 0.0
        %957 = vmatmul.mubr.f32.gmra.mxu0 %v723
        %v958 = vpop.f32.mrf.mxu0
        %v959 = vadd.f32 0.0, %v958
        %v960 = vpop.f32.mrf.mxu0
        %v961 = vadd.f32 0.0, %v960
        %962 = vmatprep.mubr.f32.mxu0 0.0
        %963 = vmatmul.mubr.f32.gmra.mxu0 %v726
        %v964 = vpop.f32.mrf.mxu0
        %v965 = vadd.f32 0.0, %v964
        %v966 = vpop.f32.mrf.mxu0
        %v967 = vadd.f32 0.0, %v966
        %968 = vmatprep.mubr.f32.mxu0 0.0
        %969 = vmatmul.mubr.f32.gmra.mxu0 %v729
        %v970 = vpop.f32.mrf.mxu0
        %v971 = vadd.f32 0.0, %v970
        %v972 = vpop.f32.mrf.mxu0
        %v973 = vadd.f32 0.0, %v972
        %974 = vmatprep.mubr.f32.mxu0 0.0
        %975 = vmatmul.mubr.f32.gmra.mxu0 %v732
        %v976 = vpop.f32.mrf.mxu0
        %v977 = vadd.f32 0.0, %v976
        %v978 = vpop.f32.mrf.mxu0
        %v979 = vadd.f32 0.0, %v978
        %980 = vmatprep.mubr.f32.mxu0 0.0
        %981 = vmatmul.mubr.f32.gmra.mxu0 %v735
        %v982 = vpop.f32.mrf.mxu0
        %v983 = vadd.f32 0.0, %v982
        %v984 = vpop.f32.mrf.mxu0
        %v985 = vadd.f32 0.0, %v984
        %986 = vmatprep.mubr.f32.mxu0 0.0
        %987 = vmatmul.mubr.f32.gmra.mxu0 %v738
        %v988 = vpop.f32.mrf.mxu0
        %v989 = vadd.f32 0.0, %v988
        %v990 = vpop.f32.mrf.mxu0
        %v991 = vadd.f32 0.0, %v990
        %992 = vmatprep.mubr.f32.mxu0 0.0
        %993 = vmatmul.mubr.f32.gmra.mxu0 %v741
        %v994 = vpop.f32.mrf.mxu0
        %v995 = vadd.f32 0.0, %v994
        %v996 = vpop.f32.mrf.mxu0
        %v997 = vadd.f32 0.0, %v996
        %998 = vmatprep.mubr.f32.mxu0 0.0
        %999 = vmatmul.mubr.f32.gmra.mxu0 %v744
        %v1000 = vpop.f32.mrf.mxu0
        %v1001 = vadd.f32 0.0, %v1000
        %v1002 = vpop.f32.mrf.mxu0
        %v1003 = vadd.f32 0.0, %v1002
        %1004 = vmatprep.mubr.f32.mxu0 0.0
        %1005 = vmatmul.mubr.f32.gmra.mxu0 %v747
        %v1006 = vpop.f32.mrf.mxu0
        %v1007 = vadd.f32 0.0, %v1006
        %v1008 = vpop.f32.mrf.mxu0
        %v1009 = vadd.f32 0.0, %v1008
        %1010 = vdwg.mxu0
        %v1011 = vmax.f32 %v821, %v833
        %v1012 = vmax.f32 %v827, %v839
        %v1013 = vmax.f32 %v1011, %v845
        %v1014 = vmax.f32 %v1012, %v851
        %v1015 = vmax.f32 %v1013, %v857
        %v1016 = vmax.f32 %v1014, %v863
        %v1017 = vmax.f32 %v1015, %v869
        %v1018 = vmax.f32 %v1016, %v875
        %v1019 = vmax.f32 %v1017, %v881
        %v1020 = vmax.f32 %v1018, %v887
        %v1021 = vmax.f32 %v1019, %v893
        %v1022 = vmax.f32 %v1020, %v899
        %v1023 = vmax.f32 %v1021, %v905
        %v1024 = vmax.f32 %v1022, %v911
        %v1025 = vmax.f32 %v1023, %v917
        %v1026 = vmax.f32 %v1024, %v923
        %v1027 = vmax.f32 %v1025, %v929
        %v1028 = vmax.f32 %v1026, %v935
        %v1029 = vmax.f32 %v1027, %v941
        %v1030 = vmax.f32 %v1028, %v947
        %v1031 = vmax.f32 %v1029, %v953
        %v1032 = vmax.f32 %v1030, %v959
        %v1033 = vmax.f32 %v1031, %v965
        %v1034 = vmax.f32 %v1032, %v971
        %v1035 = vmax.f32 %v1033, %v977
        %v1036 = vmax.f32 %v1034, %v983
        %v1037 = vmax.f32 %v1035, %v989
        %v1038 = vmax.f32 %v1036, %v995
        %v1039 = vmax.f32 %v1037, %v1001
        %v1040 = vmax.f32 %v1038, %v1007
        %v1041 = vmax.f32 %v1039, %v1040
        %v1042 = vrot.slane %v1041, 4
        %v1043 = vmax.f32 %v1041, %v1042
        %v1044 = vrot.slane %v1043, 2
        %v1045 = vmax.f32 %v1043, %v1044
        %v1046 = vrot.slane %v1045, 1
        %v1047 = vmax.f32 %v1045, %v1046
        %v1048 = vmax.f32 %v823, %v835
        %v1049 = vmax.f32 %v829, %v841
        %v1050 = vmax.f32 %v1048, %v847
        %v1051 = vmax.f32 %v1049, %v853
        %v1052 = vmax.f32 %v1050, %v859
        %v1053 = vmax.f32 %v1051, %v865
        %v1054 = vmax.f32 %v1052, %v871
        %v1055 = vmax.f32 %v1053, %v877
        %v1056 = vmax.f32 %v1054, %v883
        %v1057 = vmax.f32 %v1055, %v889
        %v1058 = vmax.f32 %v1056, %v895
        %v1059 = vmax.f32 %v1057, %v901
        %v1060 = vmax.f32 %v1058, %v907
        %v1061 = vmax.f32 %v1059, %v913
        %v1062 = vmax.f32 %v1060, %v919
        %v1063 = vmax.f32 %v1061, %v925
        %v1064 = vmax.f32 %v1062, %v931
        %v1065 = vmax.f32 %v1063, %v937
        %v1066 = vmax.f32 %v1064, %v943
        %v1067 = vmax.f32 %v1065, %v949
        %v1068 = vmax.f32 %v1066, %v955
        %v1069 = vmax.f32 %v1067, %v961
        %v1070 = vmax.f32 %v1068, %v967
        %v1071 = vmax.f32 %v1069, %v973
        %v1072 = vmax.f32 %v1070, %v979
        %v1073 = vmax.f32 %v1071, %v985
        %v1074 = vmax.f32 %v1072, %v991
        %v1075 = vmax.f32 %v1073, %v997
        %v1076 = vmax.f32 %v1074, %v1003
        %v1077 = vmax.f32 %v1075, %v1009
        %v1078 = vmax.f32 %v1076, %v1077
        %v1079 = vrot.slane %v1078, 4
        %v1080 = vmax.f32 %v1078, %v1079
        %v1081 = vrot.slane %v1080, 2
        %v1082 = vmax.f32 %v1080, %v1081
        %v1083 = vrot.slane %v1082, 1
        %v1084 = vmax.f32 %v1082, %v1083
        %v1085 = vsub.f32 %v821, %v1047
        %v1086 = vsub.f32 %v823, %v1084
        %v1087 = vsub.f32 %v827, %v1047
        %v1088 = vsub.f32 %v829, %v1084
        %v1089 = vsub.f32 %v833, %v1047
        %v1090 = vsub.f32 %v835, %v1084
        %v1091 = vsub.f32 %v839, %v1047
        %v1092 = vsub.f32 %v841, %v1084
        %v1093 = vsub.f32 %v845, %v1047
        %v1094 = vsub.f32 %v847, %v1084
        %v1095 = vsub.f32 %v851, %v1047
        %v1096 = vsub.f32 %v853, %v1084
        %v1097 = vsub.f32 %v857, %v1047
        %v1098 = vsub.f32 %v859, %v1084
        %v1099 = vsub.f32 %v863, %v1047
        %v1100 = vsub.f32 %v865, %v1084
        %v1101 = vsub.f32 %v869, %v1047
        %v1102 = vsub.f32 %v871, %v1084
        %v1103 = vsub.f32 %v875, %v1047
        %v1104 = vsub.f32 %v877, %v1084
        %v1105 = vsub.f32 %v881, %v1047
        %v1106 = vsub.f32 %v883, %v1084
        %v1107 = vsub.f32 %v887, %v1047
        %v1108 = vsub.f32 %v889, %v1084
        %v1109 = vsub.f32 %v893, %v1047
        %v1110 = vsub.f32 %v895, %v1084
        %v1111 = vsub.f32 %v899, %v1047
        %v1112 = vsub.f32 %v901, %v1084
        %v1113 = vsub.f32 %v905, %v1047
        %v1114 = vsub.f32 %v907, %v1084
        %v1115 = vsub.f32 %v911, %v1047
        %v1116 = vsub.f32 %v913, %v1084
        %v1117 = vsub.f32 %v917, %v1047
        %v1118 = vsub.f32 %v919, %v1084
        %v1119 = vsub.f32 %v923, %v1047
        %v1120 = vsub.f32 %v925, %v1084
        %v1121 = vsub.f32 %v929, %v1047
        %v1122 = vsub.f32 %v931, %v1084
        %v1123 = vsub.f32 %v935, %v1047
        %v1124 = vsub.f32 %v937, %v1084
        %v1125 = vsub.f32 %v941, %v1047
        %v1126 = vsub.f32 %v943, %v1084
        %v1127 = vsub.f32 %v947, %v1047
        %v1128 = vsub.f32 %v949, %v1084
        %v1129 = vsub.f32 %v953, %v1047
        %v1130 = vsub.f32 %v955, %v1084
        %v1131 = vsub.f32 %v959, %v1047
        %v1132 = vsub.f32 %v961, %v1084
        %v1133 = vsub.f32 %v965, %v1047
        %v1134 = vsub.f32 %v967, %v1084
        %v1135 = vsub.f32 %v971, %v1047
        %v1136 = vsub.f32 %v973, %v1084
        %v1137 = vsub.f32 %v977, %v1047
        %v1138 = vsub.f32 %v979, %v1084
        %v1139 = vsub.f32 %v983, %v1047
        %v1140 = vsub.f32 %v985, %v1084
        %v1141 = vsub.f32 %v989, %v1047
        %v1142 = vsub.f32 %v991, %v1084
        %v1143 = vsub.f32 %v995, %v1047
        %v1144 = vsub.f32 %v997, %v1084
        %v1145 = vsub.f32 %v1001, %v1047
        %v1146 = vsub.f32 %v1003, %v1084
        %v1147 = vsub.f32 %v1007, %v1047
        %v1148 = vsub.f32 %v1009, %v1084
        %v1149 = vmul.f32 %v1085, 1.442695
        %v1150 = vpow.pop %v1149
        %v1151 = vmul.f32 %v1086, 1.442695
        %v1152 = vpow.pop %v1151
        %v1153 = vmul.f32 %v1087, 1.442695
        %v1154 = vpow.pop %v1153
        %v1155 = vmul.f32 %v1088, 1.442695
        %v1156 = vpow.pop %v1155
        %v1157 = vmul.f32 %v1089, 1.442695
        %v1158 = vpow.pop %v1157
        %v1159 = vmul.f32 %v1090, 1.442695
        %v1160 = vpow.pop %v1159
        %v1161 = vmul.f32 %v1091, 1.442695
        %v1162 = vpow.pop %v1161
        %v1163 = vmul.f32 %v1092, 1.442695
        %v1164 = vpow.pop %v1163
        %v1165 = vmul.f32 %v1093, 1.442695
        %v1166 = vpow.pop %v1165
        %v1167 = vmul.f32 %v1094, 1.442695
        %v1168 = vpow.pop %v1167
        %v1169 = vmul.f32 %v1095, 1.442695
        %v1170 = vpow.pop %v1169
        %v1171 = vmul.f32 %v1096, 1.442695
        %v1172 = vpow.pop %v1171
        %v1173 = vmul.f32 %v1097, 1.442695
        %v1174 = vpow.pop %v1173
        %v1175 = vmul.f32 %v1098, 1.442695
        %v1176 = vpow.pop %v1175
        %v1177 = vmul.f32 %v1099, 1.442695
        %v1178 = vpow.pop %v1177
        %v1179 = vmul.f32 %v1100, 1.442695
        %v1180 = vpow.pop %v1179
        %v1181 = vmul.f32 %v1101, 1.442695
        %v1182 = vpow.pop %v1181
        %v1183 = vmul.f32 %v1102, 1.442695
        %v1184 = vpow.pop %v1183
        %v1185 = vmul.f32 %v1103, 1.442695
        %v1186 = vpow.pop %v1185
        %v1187 = vmul.f32 %v1104, 1.442695
        %v1188 = vpow.pop %v1187
        %v1189 = vmul.f32 %v1105, 1.442695
        %v1190 = vpow.pop %v1189
        %v1191 = vmul.f32 %v1106, 1.442695
        %v1192 = vpow.pop %v1191
        %v1193 = vmul.f32 %v1107, 1.442695
        %v1194 = vpow.pop %v1193
        %v1195 = vmul.f32 %v1108, 1.442695
        %v1196 = vpow.pop %v1195
        %v1197 = vmul.f32 %v1109, 1.442695
        %v1198 = vpow.pop %v1197
        %v1199 = vmul.f32 %v1110, 1.442695
        %v1200 = vpow.pop %v1199
        %v1201 = vmul.f32 %v1111, 1.442695
        %v1202 = vpow.pop %v1201
        %v1203 = vmul.f32 %v1112, 1.442695
        %v1204 = vpow.pop %v1203
        %v1205 = vmul.f32 %v1113, 1.442695
        %v1206 = vpow.pop %v1205
        %v1207 = vmul.f32 %v1114, 1.442695
        %v1208 = vpow.pop %v1207
        %v1209 = vmul.f32 %v1115, 1.442695
        %v1210 = vpow.pop %v1209
        %v1211 = vmul.f32 %v1116, 1.442695
        %v1212 = vpow.pop %v1211
        %v1213 = vmul.f32 %v1117, 1.442695
        %v1214 = vpow.pop %v1213
        %v1215 = vmul.f32 %v1118, 1.442695
        %v1216 = vpow.pop %v1215
        %v1217 = vmul.f32 %v1119, 1.442695
        %v1218 = vpow.pop %v1217
        %v1219 = vmul.f32 %v1120, 1.442695
        %v1220 = vpow.pop %v1219
        %v1221 = vmul.f32 %v1121, 1.442695
        %v1222 = vpow.pop %v1221
        %v1223 = vmul.f32 %v1122, 1.442695
        %v1224 = vpow.pop %v1223
        %v1225 = vmul.f32 %v1123, 1.442695
        %v1226 = vpow.pop %v1225
        %v1227 = vmul.f32 %v1124, 1.442695
        %v1228 = vpow.pop %v1227
        %v1229 = vmul.f32 %v1125, 1.442695
        %v1230 = vpow.pop %v1229
        %v1231 = vmul.f32 %v1126, 1.442695
        %v1232 = vpow.pop %v1231
        %v1233 = vmul.f32 %v1127, 1.442695
        %v1234 = vpow.pop %v1233
        %v1235 = vmul.f32 %v1128, 1.442695
        %v1236 = vpow.pop %v1235
        %v1237 = vmul.f32 %v1129, 1.442695
        %v1238 = vpow.pop %v1237
        %v1239 = vmul.f32 %v1130, 1.442695
        %v1240 = vpow.pop %v1239
        %v1241 = vmul.f32 %v1131, 1.442695
        %v1242 = vpow.pop %v1241
        %v1243 = vmul.f32 %v1132, 1.442695
        %v1244 = vpow.pop %v1243
        %v1245 = vmul.f32 %v1133, 1.442695
        %v1246 = vpow.pop %v1245
        %v1247 = vmul.f32 %v1134, 1.442695
        %v1248 = vpow.pop %v1247
        %v1249 = vmul.f32 %v1135, 1.442695
        %v1250 = vpow.pop %v1249
        %v1251 = vmul.f32 %v1136, 1.442695
        %v1252 = vpow.pop %v1251
        %v1253 = vmul.f32 %v1137, 1.442695
        %v1254 = vpow.pop %v1253
        %v1255 = vmul.f32 %v1138, 1.442695
        %v1256 = vpow.pop %v1255
        %v1257 = vmul.f32 %v1139, 1.442695
        %v1258 = vpow.pop %v1257
        %v1259 = vmul.f32 %v1140, 1.442695
        %v1260 = vpow.pop %v1259
        %v1261 = vmul.f32 %v1141, 1.442695
        %v1262 = vpow.pop %v1261
        %v1263 = vmul.f32 %v1142, 1.442695
        %v1264 = vpow.pop %v1263
        %v1265 = vmul.f32 %v1143, 1.442695
        %v1266 = vpow.pop %v1265
        %v1267 = vmul.f32 %v1144, 1.442695
        %v1268 = vpow.pop %v1267
        %v1269 = vmul.f32 %v1145, 1.442695
        %v1270 = vpow.pop %v1269
        %v1271 = vmul.f32 %v1146, 1.442695
        %v1272 = vpow.pop %v1271
        %v1273 = vmul.f32 %v1147, 1.442695
        %v1274 = vpow.pop %v1273
        %v1275 = vmul.f32 %v1148, 1.442695
        %v1276 = vpow.pop %v1275
        %v1277 = vadd.f32 %v1150, %v1154
        %v1278 = vadd.f32 %v1277, %v1158
        %v1279 = vadd.f32 %v1278, %v1162
        %v1280 = vadd.f32 %v1279, %v1166
        %v1281 = vadd.f32 %v1280, %v1170
        %v1282 = vadd.f32 %v1281, %v1174
        %v1283 = vadd.f32 %v1282, %v1178
        %v1284 = vadd.f32 %v1283, %v1182
        %v1285 = vadd.f32 %v1284, %v1186
        %v1286 = vadd.f32 %v1285, %v1190
        %v1287 = vadd.f32 %v1286, %v1194
        %v1288 = vadd.f32 %v1287, %v1198
        %v1289 = vadd.f32 %v1288, %v1202
        %v1290 = vadd.f32 %v1289, %v1206
        %v1291 = vadd.f32 %v1290, %v1210
        %v1292 = vadd.f32 %v1291, %v1214
        %v1293 = vadd.f32 %v1292, %v1218
        %v1294 = vadd.f32 %v1293, %v1222
        %v1295 = vadd.f32 %v1294, %v1226
        %v1296 = vadd.f32 %v1295, %v1230
        %v1297 = vadd.f32 %v1296, %v1234
        %v1298 = vadd.f32 %v1297, %v1238
        %v1299 = vadd.f32 %v1298, %v1242
        %v1300 = vadd.f32 %v1299, %v1246
        %v1301 = vadd.f32 %v1300, %v1250
        %v1302 = vadd.f32 %v1301, %v1254
        %v1303 = vadd.f32 %v1302, %v1258
        %v1304 = vadd.f32 %v1303, %v1262
        %v1305 = vadd.f32 %v1304, %v1266
        %v1306 = vadd.f32 %v1305, %v1270
        %v1307 = vadd.f32 %v1306, %v1274
        %v1308 = vrot.slane %v1307, 4
        %v1309 = vadd.f32 %v1307, %v1308
        %v1310 = vrot.slane %v1309, 2
        %v1311 = vadd.f32 %v1309, %v1310
        %v1312 = vrot.slane %v1311, 1
        %v1313 = vadd.f32 %v1311, %v1312
        %v1314 = vadd.f32 %v1152, %v1156
        %v1315 = vadd.f32 %v1314, %v1160
        %v1316 = vadd.f32 %v1315, %v1164
        %v1317 = vadd.f32 %v1316, %v1168
        %v1318 = vadd.f32 %v1317, %v1172
        %v1319 = vadd.f32 %v1318, %v1176
        %v1320 = vadd.f32 %v1319, %v1180
        %v1321 = vadd.f32 %v1320, %v1184
        %v1322 = vadd.f32 %v1321, %v1188
        %v1323 = vadd.f32 %v1322, %v1192
        %v1324 = vadd.f32 %v1323, %v1196
        %v1325 = vadd.f32 %v1324, %v1200
        %v1326 = vadd.f32 %v1325, %v1204
        %v1327 = vadd.f32 %v1326, %v1208
        %v1328 = vadd.f32 %v1327, %v1212
        %v1329 = vadd.f32 %v1328, %v1216
        %v1330 = vadd.f32 %v1329, %v1220
        %v1331 = vadd.f32 %v1330, %v1224
        %v1332 = vadd.f32 %v1331, %v1228
        %v1333 = vadd.f32 %v1332, %v1232
        %v1334 = vadd.f32 %v1333, %v1236
        %v1335 = vadd.f32 %v1334, %v1240
        %v1336 = vadd.f32 %v1335, %v1244
        %v1337 = vadd.f32 %v1336, %v1248
        %v1338 = vadd.f32 %v1337, %v1252
        %v1339 = vadd.f32 %v1338, %v1256
        %v1340 = vadd.f32 %v1339, %v1260
        %v1341 = vadd.f32 %v1340, %v1264
        %v1342 = vadd.f32 %v1341, %v1268
        %v1343 = vadd.f32 %v1342, %v1272
        %v1344 = vadd.f32 %v1343, %v1276
        %v1345 = vrot.slane %v1344, 4
        %v1346 = vadd.f32 %v1344, %v1345
        %v1347 = vrot.slane %v1346, 2
        %v1348 = vadd.f32 %v1346, %v1347
        %v1349 = vrot.slane %v1348, 1
        %v1350 = vadd.f32 %v1348, %v1349
        %v1351 = vrcp.pop %v1313
        %v1352 = vrcp.pop %v1350
        %v1353 = vmul.f32 %v1150, %v1351
        %v1354 = vmul.f32 %v1152, %v1352
        %v1355 = vmul.f32 %v1154, %v1351
        %v1356 = vmul.f32 %v1156, %v1352
        %v1357 = vmul.f32 %v1158, %v1351
        %v1358 = vmul.f32 %v1160, %v1352
        %v1359 = vmul.f32 %v1162, %v1351
        %v1360 = vmul.f32 %v1164, %v1352
        %v1361 = vmul.f32 %v1166, %v1351
        %v1362 = vmul.f32 %v1168, %v1352
        %v1363 = vmul.f32 %v1170, %v1351
        %v1364 = vmul.f32 %v1172, %v1352
        %v1365 = vmul.f32 %v1174, %v1351
        %v1366 = vmul.f32 %v1176, %v1352
        %v1367 = vmul.f32 %v1178, %v1351
        %v1368 = vmul.f32 %v1180, %v1352
        %v1369 = vmul.f32 %v1182, %v1351
        %v1370 = vmul.f32 %v1184, %v1352
        %v1371 = vmul.f32 %v1186, %v1351
        %v1372 = vmul.f32 %v1188, %v1352
        %v1373 = vmul.f32 %v1190, %v1351
        %v1374 = vmul.f32 %v1192, %v1352
        %v1375 = vmul.f32 %v1194, %v1351
        %v1376 = vmul.f32 %v1196, %v1352
        %v1377 = vmul.f32 %v1198, %v1351
        %v1378 = vmul.f32 %v1200, %v1352
        %v1379 = vmul.f32 %v1202, %v1351
        %v1380 = vmul.f32 %v1204, %v1352
        %v1381 = vmul.f32 %v1206, %v1351
        %v1382 = vmul.f32 %v1208, %v1352
        %v1383 = vmul.f32 %v1210, %v1351
        %v1384 = vmul.f32 %v1212, %v1352
        %v1385 = vmul.f32 %v1214, %v1351
        %v1386 = vmul.f32 %v1216, %v1352
        %v1387 = vmul.f32 %v1218, %v1351
        %v1388 = vmul.f32 %v1220, %v1352
        %v1389 = vmul.f32 %v1222, %v1351
        %v1390 = vmul.f32 %v1224, %v1352
        %v1391 = vmul.f32 %v1226, %v1351
        %v1392 = vmul.f32 %v1228, %v1352
        %v1393 = vmul.f32 %v1230, %v1351
        %v1394 = vmul.f32 %v1232, %v1352
        %v1395 = vmul.f32 %v1234, %v1351
        %v1396 = vmul.f32 %v1236, %v1352
        %v1397 = vmul.f32 %v1238, %v1351
        %v1398 = vmul.f32 %v1240, %v1352
        %v1399 = vmul.f32 %v1242, %v1351
        %v1400 = vmul.f32 %v1244, %v1352
        %v1401 = vmul.f32 %v1246, %v1351
        %v1402 = vmul.f32 %v1248, %v1352
        %v1403 = vmul.f32 %v1250, %v1351
        %v1404 = vmul.f32 %v1252, %v1352
        %v1405 = vmul.f32 %v1254, %v1351
        %v1406 = vmul.f32 %v1256, %v1352
        %v1407 = vmul.f32 %v1258, %v1351
        %v1408 = vmul.f32 %v1260, %v1352
        %v1409 = vmul.f32 %v1262, %v1351
        %v1410 = vmul.f32 %v1264, %v1352
        %v1411 = vmul.f32 %v1266, %v1351
        %v1412 = vmul.f32 %v1268, %v1352
        %v1413 = vmul.f32 %v1270, %v1351
        %v1414 = vmul.f32 %v1272, %v1352
        %v1415 = vmul.f32 %v1274, %v1351
        %v1416 = vmul.f32 %v1276, %v1352
        %v1417 = vmax.f32 %v821, %v823
        %1418 = vmax.xlane.f32.xlu0 %v1417
        %v1419 = vpop.xlane.xlu0 %1418
        %v1420 = vmax.f32 %v827, %v829
        %1421 = vmax.xlane.f32.xlu0 %v1420
        %v1422 = vpop.xlane.xlu0 %1421
        %v1423 = vmax.f32 %v833, %v835
        %1424 = vmax.xlane.f32.xlu0 %v1423
        %v1425 = vpop.xlane.xlu0 %1424
        %v1426 = vmax.f32 %v839, %v841
        %1427 = vmax.xlane.f32.xlu0 %v1426
        %v1428 = vpop.xlane.xlu0 %1427
        %v1429 = vmax.f32 %v845, %v847
        %1430 = vmax.xlane.f32.xlu0 %v1429
        %v1431 = vpop.xlane.xlu0 %1430
        %v1432 = vmax.f32 %v851, %v853
        %1433 = vmax.xlane.f32.xlu0 %v1432
        %v1434 = vpop.xlane.xlu0 %1433
        %v1435 = vmax.f32 %v857, %v859
        %1436 = vmax.xlane.f32.xlu0 %v1435
        %v1437 = vpop.xlane.xlu0 %1436
        %v1438 = vmax.f32 %v863, %v865
        %1439 = vmax.xlane.f32.xlu0 %v1438
        %v1440 = vpop.xlane.xlu0 %1439
        %v1441 = vmax.f32 %v869, %v871
        %1442 = vmax.xlane.f32.xlu0 %v1441
        %v1443 = vpop.xlane.xlu0 %1442
        %v1444 = vmax.f32 %v875, %v877
        %1445 = vmax.xlane.f32.xlu0 %v1444
        %v1446 = vpop.xlane.xlu0 %1445
        %v1447 = vmax.f32 %v881, %v883
        %1448 = vmax.xlane.f32.xlu0 %v1447
        %v1449 = vpop.xlane.xlu0 %1448
        %v1450 = vmax.f32 %v887, %v889
        %1451 = vmax.xlane.f32.xlu0 %v1450
        %v1452 = vpop.xlane.xlu0 %1451
        %v1453 = vmax.f32 %v893, %v895
        %1454 = vmax.xlane.f32.xlu0 %v1453
        %v1455 = vpop.xlane.xlu0 %1454
        %v1456 = vmax.f32 %v899, %v901
        %1457 = vmax.xlane.f32.xlu0 %v1456
        %v1458 = vpop.xlane.xlu0 %1457
        %v1459 = vmax.f32 %v905, %v907
        %1460 = vmax.xlane.f32.xlu0 %v1459
        %v1461 = vpop.xlane.xlu0 %1460
        %v1462 = vmax.f32 %v911, %v913
        %1463 = vmax.xlane.f32.xlu0 %v1462
        %v1464 = vpop.xlane.xlu0 %1463
        %v1465 = vmax.f32 %v917, %v919
        %1466 = vmax.xlane.f32.xlu0 %v1465
        %v1467 = vpop.xlane.xlu0 %1466
        %v1468 = vmax.f32 %v923, %v925
        %1469 = vmax.xlane.f32.xlu0 %v1468
        %v1470 = vpop.xlane.xlu0 %1469
        %v1471 = vmax.f32 %v929, %v931
        %1472 = vmax.xlane.f32.xlu0 %v1471
        %v1473 = vpop.xlane.xlu0 %1472
        %v1474 = vmax.f32 %v935, %v937
        %1475 = vmax.xlane.f32.xlu0 %v1474
        %v1476 = vpop.xlane.xlu0 %1475
        %v1477 = vmax.f32 %v941, %v943
        %1478 = vmax.xlane.f32.xlu0 %v1477
        %v1479 = vpop.xlane.xlu0 %1478
        %v1480 = vmax.f32 %v947, %v949
        %1481 = vmax.xlane.f32.xlu0 %v1480
        %v1482 = vpop.xlane.xlu0 %1481
        %v1483 = vmax.f32 %v953, %v955
        %1484 = vmax.xlane.f32.xlu0 %v1483
        %v1485 = vpop.xlane.xlu0 %1484
        %v1486 = vmax.f32 %v959, %v961
        %1487 = vmax.xlane.f32.xlu0 %v1486
        %v1488 = vpop.xlane.xlu0 %1487
        %v1489 = vmax.f32 %v965, %v967
        %1490 = vmax.xlane.f32.xlu0 %v1489
        %v1491 = vpop.xlane.xlu0 %1490
        %v1492 = vmax.f32 %v971, %v973
        %1493 = vmax.xlane.f32.xlu0 %v1492
        %v1494 = vpop.xlane.xlu0 %1493
        %v1495 = vmax.f32 %v977, %v979
        %1496 = vmax.xlane.f32.xlu0 %v1495
        %v1497 = vpop.xlane.xlu0 %1496
        %v1498 = vmax.f32 %v983, %v985
        %1499 = vmax.xlane.f32.xlu0 %v1498
        %v1500 = vpop.xlane.xlu0 %1499
        %v1501 = vmax.f32 %v989, %v991
        %1502 = vmax.xlane.f32.xlu0 %v1501
        %v1503 = vpop.xlane.xlu0 %1502
        %v1504 = vmax.f32 %v995, %v997
        %1505 = vmax.xlane.f32.xlu0 %v1504
        %v1506 = vpop.xlane.xlu0 %1505
        %v1507 = vmax.f32 %v1001, %v1003
        %1508 = vmax.xlane.f32.xlu0 %v1507
        %v1509 = vpop.xlane.xlu0 %1508
        %v1510 = vmax.f32 %v1007, %v1009
        %1511 = vmax.xlane.f32.xlu0 %v1510
        %v1512 = vpop.xlane.xlu0 %1511
        %v1513 = vsub.f32 %v821, %v1419
        %v1514 = vsub.f32 %v823, %v1419
        %v1515 = vsub.f32 %v827, %v1422
        %v1516 = vsub.f32 %v829, %v1422
        %v1517 = vsub.f32 %v833, %v1425
        %v1518 = vsub.f32 %v835, %v1425
        %v1519 = vsub.f32 %v839, %v1428
        %v1520 = vsub.f32 %v841, %v1428
        %v1521 = vsub.f32 %v845, %v1431
        %v1522 = vsub.f32 %v847, %v1431
        %v1523 = vsub.f32 %v851, %v1434
        %v1524 = vsub.f32 %v853, %v1434
        %v1525 = vsub.f32 %v857, %v1437
        %v1526 = vsub.f32 %v859, %v1437
        %v1527 = vsub.f32 %v863, %v1440
        %v1528 = vsub.f32 %v865, %v1440
        %v1529 = vsub.f32 %v869, %v1443
        %v1530 = vsub.f32 %v871, %v1443
        %v1531 = vsub.f32 %v875, %v1446
        %v1532 = vsub.f32 %v877, %v1446
        %v1533 = vsub.f32 %v881, %v1449
        %v1534 = vsub.f32 %v883, %v1449
        %v1535 = vsub.f32 %v887, %v1452
        %v1536 = vsub.f32 %v889, %v1452
        %v1537 = vsub.f32 %v893, %v1455
        %v1538 = vsub.f32 %v895, %v1455
        %v1539 = vsub.f32 %v899, %v1458
        %v1540 = vsub.f32 %v901, %v1458
        %v1541 = vsub.f32 %v905, %v1461
        %v1542 = vsub.f32 %v907, %v1461
        %v1543 = vsub.f32 %v911, %v1464
        %v1544 = vsub.f32 %v913, %v1464
        %v1545 = vsub.f32 %v917, %v1467
        %v1546 = vsub.f32 %v919, %v1467
        %v1547 = vsub.f32 %v923, %v1470
        %v1548 = vsub.f32 %v925, %v1470
        %v1549 = vsub.f32 %v929, %v1473
        %v1550 = vsub.f32 %v931, %v1473
        %v1551 = vsub.f32 %v935, %v1476
        %v1552 = vsub.f32 %v937, %v1476
        %v1553 = vsub.f32 %v941, %v1479
        %v1554 = vsub.f32 %v943, %v1479
        %v1555 = vsub.f32 %v947, %v1482
        %v1556 = vsub.f32 %v949, %v1482
        %v1557 = vsub.f32 %v953, %v1485
        %v1558 = vsub.f32 %v955, %v1485
        %v1559 = vsub.f32 %v959, %v1488
        %v1560 = vsub.f32 %v961, %v1488
        %v1561 = vsub.f32 %v965, %v1491
        %v1562 = vsub.f32 %v967, %v1491
        %v1563 = vsub.f32 %v971, %v1494
        %v1564 = vsub.f32 %v973, %v1494
        %v1565 = vsub.f32 %v977, %v1497
        %v1566 = vsub.f32 %v979, %v1497
        %v1567 = vsub.f32 %v983, %v1500
        %v1568 = vsub.f32 %v985, %v1500
        %v1569 = vsub.f32 %v989, %v1503
        %v1570 = vsub.f32 %v991, %v1503
        %v1571 = vsub.f32 %v995, %v1506
        %v1572 = vsub.f32 %v997, %v1506
        %v1573 = vsub.f32 %v1001, %v1509
        %v1574 = vsub.f32 %v1003, %v1509
        %v1575 = vsub.f32 %v1007, %v1512
        %v1576 = vsub.f32 %v1009, %v1512
        %v1577 = vmul.f32 %v1513, 1.442695
        %v1578 = vpow.pop %v1577
        %v1579 = vmul.f32 %v1514, 1.442695
        %v1580 = vpow.pop %v1579
        %v1581 = vmul.f32 %v1515, 1.442695
        %v1582 = vpow.pop %v1581
        %v1583 = vmul.f32 %v1516, 1.442695
        %v1584 = vpow.pop %v1583
        %v1585 = vmul.f32 %v1517, 1.442695
        %v1586 = vpow.pop %v1585
        %v1587 = vmul.f32 %v1518, 1.442695
        %v1588 = vpow.pop %v1587
        %v1589 = vmul.f32 %v1519, 1.442695
        %v1590 = vpow.pop %v1589
        %v1591 = vmul.f32 %v1520, 1.442695
        %v1592 = vpow.pop %v1591
        %v1593 = vmul.f32 %v1521, 1.442695
        %v1594 = vpow.pop %v1593
        %v1595 = vmul.f32 %v1522, 1.442695
        %v1596 = vpow.pop %v1595
        %v1597 = vmul.f32 %v1523, 1.442695
        %v1598 = vpow.pop %v1597
        %v1599 = vmul.f32 %v1524, 1.442695
        %v1600 = vpow.pop %v1599
        %v1601 = vmul.f32 %v1525, 1.442695
        %v1602 = vpow.pop %v1601
        %v1603 = vmul.f32 %v1526, 1.442695
        %v1604 = vpow.pop %v1603
        %v1605 = vmul.f32 %v1527, 1.442695
        %v1606 = vpow.pop %v1605
        %v1607 = vmul.f32 %v1528, 1.442695
        %v1608 = vpow.pop %v1607
        %v1609 = vmul.f32 %v1529, 1.442695
        %v1610 = vpow.pop %v1609
        %v1611 = vmul.f32 %v1530, 1.442695
        %v1612 = vpow.pop %v1611
        %v1613 = vmul.f32 %v1531, 1.442695
        %v1614 = vpow.pop %v1613
        %v1615 = vmul.f32 %v1532, 1.442695
        %v1616 = vpow.pop %v1615
        %v1617 = vmul.f32 %v1533, 1.442695
        %v1618 = vpow.pop %v1617
        %v1619 = vmul.f32 %v1534, 1.442695
        %v1620 = vpow.pop %v1619
        %v1621 = vmul.f32 %v1535, 1.442695
        %v1622 = vpow.pop %v1621
        %v1623 = vmul.f32 %v1536, 1.442695
        %v1624 = vpow.pop %v1623
        %v1625 = vmul.f32 %v1537, 1.442695
        %v1626 = vpow.pop %v1625
        %v1627 = vmul.f32 %v1538, 1.442695
        %v1628 = vpow.pop %v1627
        %v1629 = vmul.f32 %v1539, 1.442695
        %v1630 = vpow.pop %v1629
        %v1631 = vmul.f32 %v1540, 1.442695
        %v1632 = vpow.pop %v1631
        %v1633 = vmul.f32 %v1541, 1.442695
        %v1634 = vpow.pop %v1633
        %v1635 = vmul.f32 %v1542, 1.442695
        %v1636 = vpow.pop %v1635
        %v1637 = vmul.f32 %v1543, 1.442695
        %v1638 = vpow.pop %v1637
        %v1639 = vmul.f32 %v1544, 1.442695
        %v1640 = vpow.pop %v1639
        %v1641 = vmul.f32 %v1545, 1.442695
        %v1642 = vpow.pop %v1641
        %v1643 = vmul.f32 %v1546, 1.442695
        %v1644 = vpow.pop %v1643
        %v1645 = vmul.f32 %v1547, 1.442695
        %v1646 = vpow.pop %v1645
        %v1647 = vmul.f32 %v1548, 1.442695
        %v1648 = vpow.pop %v1647
        %v1649 = vmul.f32 %v1549, 1.442695
        %v1650 = vpow.pop %v1649
        %v1651 = vmul.f32 %v1550, 1.442695
        %v1652 = vpow.pop %v1651
        %v1653 = vmul.f32 %v1551, 1.442695
        %v1654 = vpow.pop %v1653
        %v1655 = vmul.f32 %v1552, 1.442695
        %v1656 = vpow.pop %v1655
        %v1657 = vmul.f32 %v1553, 1.442695
        %v1658 = vpow.pop %v1657
        %v1659 = vmul.f32 %v1554, 1.442695
        %v1660 = vpow.pop %v1659
        %v1661 = vmul.f32 %v1555, 1.442695
        %v1662 = vpow.pop %v1661
        %v1663 = vmul.f32 %v1556, 1.442695
        %v1664 = vpow.pop %v1663
        %v1665 = vmul.f32 %v1557, 1.442695
        %v1666 = vpow.pop %v1665
        %v1667 = vmul.f32 %v1558, 1.442695
        %v1668 = vpow.pop %v1667
        %v1669 = vmul.f32 %v1559, 1.442695
        %v1670 = vpow.pop %v1669
        %v1671 = vmul.f32 %v1560, 1.442695
        %v1672 = vpow.pop %v1671
        %v1673 = vmul.f32 %v1561, 1.442695
        %v1674 = vpow.pop %v1673
        %v1675 = vmul.f32 %v1562, 1.442695
        %v1676 = vpow.pop %v1675
        %v1677 = vmul.f32 %v1563, 1.442695
        %v1678 = vpow.pop %v1677
        %v1679 = vmul.f32 %v1564, 1.442695
        %v1680 = vpow.pop %v1679
        %v1681 = vmul.f32 %v1565, 1.442695
        %v1682 = vpow.pop %v1681
        %v1683 = vmul.f32 %v1566, 1.442695
        %v1684 = vpow.pop %v1683
        %v1685 = vmul.f32 %v1567, 1.442695
        %v1686 = vpow.pop %v1685
        %v1687 = vmul.f32 %v1568, 1.442695
        %v1688 = vpow.pop %v1687
        %v1689 = vmul.f32 %v1569, 1.442695
        %v1690 = vpow.pop %v1689
        %v1691 = vmul.f32 %v1570, 1.442695
        %v1692 = vpow.pop %v1691
        %v1693 = vmul.f32 %v1571, 1.442695
        %v1694 = vpow.pop %v1693
        %v1695 = vmul.f32 %v1572, 1.442695
        %v1696 = vpow.pop %v1695
        %v1697 = vmul.f32 %v1573, 1.442695
        %v1698 = vpow.pop %v1697
        %v1699 = vmul.f32 %v1574, 1.442695
        %v1700 = vpow.pop %v1699
        %v1701 = vmul.f32 %v1575, 1.442695
        %v1702 = vpow.pop %v1701
        %v1703 = vmul.f32 %v1576, 1.442695
        %v1704 = vpow.pop %v1703
        %v1705 = vadd.f32 %v1578, %v1580
        %1706 = vadd.xlane.f32.xlu0 %v1705
        %v1707 = vpop.xlane.xlu0 %1706
        %v1708 = vadd.f32 %v1582, %v1584
        %1709 = vadd.xlane.f32.xlu0 %v1708
        %v1710 = vpop.xlane.xlu0 %1709
        %v1711 = vadd.f32 %v1586, %v1588
        %1712 = vadd.xlane.f32.xlu0 %v1711
        %v1713 = vpop.xlane.xlu0 %1712
        %v1714 = vadd.f32 %v1590, %v1592
        %1715 = vadd.xlane.f32.xlu0 %v1714
        %v1716 = vpop.xlane.xlu0 %1715
        %v1717 = vadd.f32 %v1594, %v1596
        %1718 = vadd.xlane.f32.xlu0 %v1717
        %v1719 = vpop.xlane.xlu0 %1718
        %v1720 = vadd.f32 %v1598, %v1600
        %1721 = vadd.xlane.f32.xlu0 %v1720
        %v1722 = vpop.xlane.xlu0 %1721
        %v1723 = vadd.f32 %v1602, %v1604
        %1724 = vadd.xlane.f32.xlu0 %v1723
        %v1725 = vpop.xlane.xlu0 %1724
        %v1726 = vadd.f32 %v1606, %v1608
        %1727 = vadd.xlane.f32.xlu0 %v1726
        %v1728 = vpop.xlane.xlu0 %1727
        %v1729 = vadd.f32 %v1610, %v1612
        %1730 = vadd.xlane.f32.xlu0 %v1729
        %v1731 = vpop.xlane.xlu0 %1730
        %v1732 = vadd.f32 %v1614, %v1616
        %1733 = vadd.xlane.f32.xlu0 %v1732
        %v1734 = vpop.xlane.xlu0 %1733
        %v1735 = vadd.f32 %v1618, %v1620
        %1736 = vadd.xlane.f32.xlu0 %v1735
        %v1737 = vpop.xlane.xlu0 %1736
        %v1738 = vadd.f32 %v1622, %v1624
        %1739 = vadd.xlane.f32.xlu0 %v1738
        %v1740 = vpop.xlane.xlu0 %1739
        %v1741 = vadd.f32 %v1626, %v1628
        %1742 = vadd.xlane.f32.xlu0 %v1741
        %v1743 = vpop.xlane.xlu0 %1742
        %v1744 = vadd.f32 %v1630, %v1632
        %1745 = vadd.xlane.f32.xlu0 %v1744
        %v1746 = vpop.xlane.xlu0 %1745
        %v1747 = vadd.f32 %v1634, %v1636
        %1748 = vadd.xlane.f32.xlu0 %v1747
        %v1749 = vpop.xlane.xlu0 %1748
        %v1750 = vadd.f32 %v1638, %v1640
        %1751 = vadd.xlane.f32.xlu0 %v1750
        %v1752 = vpop.xlane.xlu0 %1751
        %v1753 = vadd.f32 %v1642, %v1644
        %1754 = vadd.xlane.f32.xlu0 %v1753
        %v1755 = vpop.xlane.xlu0 %1754
        %v1756 = vadd.f32 %v1646, %v1648
        %1757 = vadd.xlane.f32.xlu0 %v1756
        %v1758 = vpop.xlane.xlu0 %1757
        %v1759 = vadd.f32 %v1650, %v1652
        %1760 = vadd.xlane.f32.xlu0 %v1759
        %v1761 = vpop.xlane.xlu0 %1760
        %v1762 = vadd.f32 %v1654, %v1656
        %1763 = vadd.xlane.f32.xlu0 %v1762
        %v1764 = vpop.xlane.xlu0 %1763
        %v1765 = vadd.f32 %v1658, %v1660
        %1766 = vadd.xlane.f32.xlu0 %v1765
        %v1767 = vpop.xlane.xlu0 %1766
        %v1768 = vadd.f32 %v1662, %v1664
        %1769 = vadd.xlane.f32.xlu0 %v1768
        %v1770 = vpop.xlane.xlu0 %1769
        %v1771 = vadd.f32 %v1666, %v1668
        %1772 = vadd.xlane.f32.xlu0 %v1771
        %v1773 = vpop.xlane.xlu0 %1772
        %v1774 = vadd.f32 %v1670, %v1672
        %1775 = vadd.xlane.f32.xlu0 %v1774
        %v1776 = vpop.xlane.xlu0 %1775
        %v1777 = vadd.f32 %v1674, %v1676
        %1778 = vadd.xlane.f32.xlu0 %v1777
        %v1779 = vpop.xlane.xlu0 %1778
        %v1780 = vadd.f32 %v1678, %v1680
        %1781 = vadd.xlane.f32.xlu0 %v1780
        %v1782 = vpop.xlane.xlu0 %1781
        %v1783 = vadd.f32 %v1682, %v1684
        %1784 = vadd.xlane.f32.xlu0 %v1783
        %v1785 = vpop.xlane.xlu0 %1784
        %v1786 = vadd.f32 %v1686, %v1688
        %1787 = vadd.xlane.f32.xlu0 %v1786
        %v1788 = vpop.xlane.xlu0 %1787
        %v1789 = vadd.f32 %v1690, %v1692
        %1790 = vadd.xlane.f32.xlu0 %v1789
        %v1791 = vpop.xlane.xlu0 %1790
        %v1792 = vadd.f32 %v1694, %v1696
        %1793 = vadd.xlane.f32.xlu0 %v1792
        %v1794 = vpop.xlane.xlu0 %1793
        %v1795 = vadd.f32 %v1698, %v1700
        %1796 = vadd.xlane.f32.xlu0 %v1795
        %v1797 = vpop.xlane.xlu0 %1796
        %v1798 = vadd.f32 %v1702, %v1704
        %1799 = vadd.xlane.f32.xlu0 %v1798
        %v1800 = vpop.xlane.xlu0 %1799
        %v1801 = vrcp.pop %v1707
        %v1802 = vrcp.pop %v1710
        %v1803 = vrcp.pop %v1713
        %v1804 = vrcp.pop %v1716
        %v1805 = vrcp.pop %v1719
        %v1806 = vrcp.pop %v1722
        %v1807 = vrcp.pop %v1725
        %v1808 = vrcp.pop %v1728
        %v1809 = vrcp.pop %v1731
        %v1810 = vrcp.pop %v1734
        %v1811 = vrcp.pop %v1737
        %v1812 = vrcp.pop %v1740
        %v1813 = vrcp.pop %v1743
        %v1814 = vrcp.pop %v1746
        %v1815 = vrcp.pop %v1749
        %v1816 = vrcp.pop %v1752
        %v1817 = vrcp.pop %v1755
        %v1818 = vrcp.pop %v1758
        %v1819 = vrcp.pop %v1761
        %v1820 = vrcp.pop %v1764
        %v1821 = vrcp.pop %v1767
        %v1822 = vrcp.pop %v1770
        %v1823 = vrcp.pop %v1773
        %v1824 = vrcp.pop %v1776
        %v1825 = vrcp.pop %v1779
        %v1826 = vrcp.pop %v1782
        %v1827 = vrcp.pop %v1785
        %v1828 = vrcp.pop %v1788
        %v1829 = vrcp.pop %v1791
        %v1830 = vrcp.pop %v1794
        %v1831 = vrcp.pop %v1797
        %v1832 = vrcp.pop %v1800
        %v1833 = vmul.f32 %v1578, %v1801
        %v1834 = vmul.f32 %v1580, %v1801
        %v1835 = vmul.f32 %v1582, %v1802
        %v1836 = vmul.f32 %v1584, %v1802
        %v1837 = vmul.f32 %v1586, %v1803
        %v1838 = vmul.f32 %v1588, %v1803
        %v1839 = vmul.f32 %v1590, %v1804
        %v1840 = vmul.f32 %v1592, %v1804
        %v1841 = vmul.f32 %v1594, %v1805
        %v1842 = vmul.f32 %v1596, %v1805
        %v1843 = vmul.f32 %v1598, %v1806
        %v1844 = vmul.f32 %v1600, %v1806
        %v1845 = vmul.f32 %v1602, %v1807
        %v1846 = vmul.f32 %v1604, %v1807
        %v1847 = vmul.f32 %v1606, %v1808
        %v1848 = vmul.f32 %v1608, %v1808
        %v1849 = vmul.f32 %v1610, %v1809
        %v1850 = vmul.f32 %v1612, %v1809
        %v1851 = vmul.f32 %v1614, %v1810
        %v1852 = vmul.f32 %v1616, %v1810
        %v1853 = vmul.f32 %v1618, %v1811
        %v1854 = vmul.f32 %v1620, %v1811
        %v1855 = vmul.f32 %v1622, %v1812
        %v1856 = vmul.f32 %v1624, %v1812
        %v1857 = vmul.f32 %v1626, %v1813
        %v1858 = vmul.f32 %v1628, %v1813
        %v1859 = vmul.f32 %v1630, %v1814
        %v1860 = vmul.f32 %v1632, %v1814
        %v1861 = vmul.f32 %v1634, %v1815
        %v1862 = vmul.f32 %v1636, %v1815
        %v1863 = vmul.f32 %v1638, %v1816
        %v1864 = vmul.f32 %v1640, %v1816
        %v1865 = vmul.f32 %v1642, %v1817
        %v1866 = vmul.f32 %v1644, %v1817
        %v1867 = vmul.f32 %v1646, %v1818
        %v1868 = vmul.f32 %v1648, %v1818
        %v1869 = vmul.f32 %v1650, %v1819
        %v1870 = vmul.f32 %v1652, %v1819
        %v1871 = vmul.f32 %v1654, %v1820
        %v1872 = vmul.f32 %v1656, %v1820
        %v1873 = vmul.f32 %v1658, %v1821
        %v1874 = vmul.f32 %v1660, %v1821
        %v1875 = vmul.f32 %v1662, %v1822
        %v1876 = vmul.f32 %v1664, %v1822
        %v1877 = vmul.f32 %v1666, %v1823
        %v1878 = vmul.f32 %v1668, %v1823
        %v1879 = vmul.f32 %v1670, %v1824
        %v1880 = vmul.f32 %v1672, %v1824
        %v1881 = vmul.f32 %v1674, %v1825
        %v1882 = vmul.f32 %v1676, %v1825
        %v1883 = vmul.f32 %v1678, %v1826
        %v1884 = vmul.f32 %v1680, %v1826
        %v1885 = vmul.f32 %v1682, %v1827
        %v1886 = vmul.f32 %v1684, %v1827
        %v1887 = vmul.f32 %v1686, %v1828
        %v1888 = vmul.f32 %v1688, %v1828
        %v1889 = vmul.f32 %v1690, %v1829
        %v1890 = vmul.f32 %v1692, %v1829
        %v1891 = vmul.f32 %v1694, %v1830
        %v1892 = vmul.f32 %v1696, %v1830
        %v1893 = vmul.f32 %v1698, %v1831
        %v1894 = vmul.f32 %v1700, %v1831
        %v1895 = vmul.f32 %v1702, %v1832
        %v1896 = vmul.f32 %v1704, %v1832
        %1897 = vxpose.xlu0.b32.start [1/16] %v587, 128
        %1898 = vxpose.xlu0.b32.cont [2/16] 0.0, 128
        %1899 = vxpose.xlu0.b32.cont [3/16] 0.0, 128
        %1900 = vxpose.xlu0.b32.cont [4/16] 0.0, 128
        %1901 = vxpose.xlu0.b32.cont [5/16] 0.0, 128
        %1902 = vxpose.xlu0.b32.cont [6/16] 0.0, 128
        %1903 = vxpose.xlu0.b32.cont [7/16] 0.0, 128
        %1904 = vxpose.xlu0.b32.cont [8/16] 0.0, 128
        %1905 = vxpose.xlu0.b32.cont [9/16] 0.0, 128
        %1906 = vxpose.xlu0.b32.cont [10/16] 0.0, 128
        %1907 = vxpose.xlu0.b32.cont [11/16] 0.0, 128
        %1908 = vxpose.xlu0.b32.cont [12/16] 0.0, 128
        %1909 = vxpose.xlu0.b32.cont [13/16] 0.0, 128
        %1910 = vxpose.xlu0.b32.cont [14/16] 0.0, 128
        %1911 = vxpose.xlu0.b32.cont [15/16] 0.0, 128
        %1912 = vxpose.xlu0.b32.end [16/16] 0.0, 128
        %v1913 = vpop.trf.xlu0
        %v1914 = vpop.trf.xlu0
        %v1915 = vpop.trf.xlu0
        %v1916 = vpop.trf.xlu0
        %v1917 = vpop.trf.xlu0
        %v1918 = vpop.trf.xlu0
        %v1919 = vpop.trf.xlu0
        %v1920 = vpop.trf.xlu0
        %v1921 = vpop.trf.xlu0
        %v1922 = vpop.trf.xlu0
        %v1923 = vpop.trf.xlu0
        %v1924 = vpop.trf.xlu0
        %v1925 = vpop.trf.xlu0
        %v1926 = vpop.trf.xlu0
        %v1927 = vpop.trf.xlu0
        %v1928 = vpop.trf.xlu0
        %v1930 = vsel %vm652, %v1913, 0
        %v1932 = vsel %vm749, %v401, 0
        %v1934 = vsel %vm749, %v403, 0
        %1936 = vmatprep.subr.mxu0 0.0
        %1937 = vmatpush1.msra.mxu0 0.0
        %1938 = vmatprep.subr.mxu0 0.0
        %1939 = vmatpush1.msra.mxu0 0.0
        %1940 = vmatprep.subr.mxu0 0.0
        %1941 = vmatpush1.msra.mxu0 0.0
        %1942 = vmatprep.subr.mxu0 0.0
        %1943 = vmatpush1.msra.mxu0 0.0
        %1944 = vmatprep.subr.mxu0 0.0
        %1945 = vmatpush1.msra.mxu0 0.0
        %1946 = vmatprep.subr.mxu0 0.0
        %1947 = vmatpush1.msra.mxu0 0.0
        %1948 = vmatprep.subr.mxu0 0.0
        %1949 = vmatpush1.msra.mxu0 0.0
        %1950 = vmatprep.subr.mxu0 0.0
        %1951 = vmatpush1.msra.mxu0 0.0
        %1952 = vmatprep.subr.mxu0 0.0
        %1953 = vmatpush1.msra.mxu0 0.0
        %1954 = vmatprep.subr.mxu0 0.0
        %1955 = vmatpush1.msra.mxu0 0.0
        %1956 = vmatprep.subr.mxu0 0.0
        %1957 = vmatpush1.msra.mxu0 0.0
        %1958 = vmatprep.subr.mxu0 0.0
        %1959 = vmatpush1.msra.mxu0 0.0
        %1960 = vmatprep.subr.mxu0 0.0
        %1961 = vmatpush1.msra.mxu0 0.0
        %1962 = vmatprep.subr.mxu0 0.0
        %1963 = vmatpush1.msra.mxu0 0.0
        %1964 = vmatprep.subr.mxu0 0.0
        %1965 = vmatpush1.msra.mxu0 0.0
        %1966 = vmatprep.subr.mxu0 %v1934
        %1967 = vmatpush1.msra.mxu0 %v1932
        %1968 = vmatprep.subr.mxu0 0.0
        %1969 = vmatpush2.msra.mxu0 0.0
        %1970 = vmatprep.subr.mxu0 0.0
        %1971 = vmatpush2.msra.mxu0 0.0
        %1972 = vmatprep.subr.mxu0 0.0
        %1973 = vmatpush2.msra.mxu0 0.0
        %1974 = vmatprep.subr.mxu0 0.0
        %1975 = vmatpush2.msra.mxu0 0.0
        %1976 = vmatprep.subr.mxu0 0.0
        %1977 = vmatpush2.msra.mxu0 0.0
        %1978 = vmatprep.subr.mxu0 0.0
        %1979 = vmatpush2.msra.mxu0 0.0
        %1980 = vmatprep.subr.mxu0 0.0
        %1981 = vmatpush2.msra.mxu0 0.0
        %1982 = vmatprep.subr.mxu0 0.0
        %1983 = vmatpush2.msra.mxu0 0.0
        %1984 = vmatprep.subr.mxu0 0.0
        %1985 = vmatpush2.msra.mxu0 0.0
        %1986 = vmatprep.subr.mxu0 0.0
        %1987 = vmatpush2.msra.mxu0 0.0
        %1988 = vmatprep.subr.mxu0 0.0
        %1989 = vmatpush2.msra.mxu0 0.0
        %1990 = vmatprep.subr.mxu0 0.0
        %1991 = vmatpush2.msra.mxu0 0.0
        %1992 = vmatprep.subr.mxu0 0.0
        %1993 = vmatpush2.msra.mxu0 0.0
        %1994 = vmatprep.subr.mxu0 0.0
        %1995 = vmatpush2.msra.mxu0 0.0
        %1996 = vmatprep.subr.mxu0 0.0
        %1997 = vmatpush2.msra.mxu0 0.0
        %1998 = vmatprep.subr.mxu0 0.0
        %1999 = vmatpush2.msra.mxu0 0.0
        %2000 = vmatprep.mubr.f32.mxu0 0.0
        %2001 = vmatmul.mubr.f32.gmra.mxu0 %v1930
        %v2002 = vpop.f32.mrf.mxu0
        %v2003 = vadd.f32 0.0, %v2002
        %v2004 = vpop.f32.mrf.mxu0
        %v2005 = vadd.f32 0.0, %v2004
        %2006 = vdwg.mxu0
        %2007 = vmatprep.subr.mxu0 %v1384
        %2008 = vmatpush1.msra.mxu0 %v1383
        %2009 = vmatprep.subr.mxu0 %v1382
        %2010 = vmatpush1.msra.mxu0 %v1381
        %2011 = vmatprep.subr.mxu0 %v1380
        %2012 = vmatpush1.msra.mxu0 %v1379
        %2013 = vmatprep.subr.mxu0 %v1378
        %2014 = vmatpush1.msra.mxu0 %v1377
        %2015 = vmatprep.subr.mxu0 %v1376
        %2016 = vmatpush1.msra.mxu0 %v1375
        %2017 = vmatprep.subr.mxu0 %v1374
        %2018 = vmatpush1.msra.mxu0 %v1373
        %2019 = vmatprep.subr.mxu0 %v1372
        %2020 = vmatpush1.msra.mxu0 %v1371
        %2021 = vmatprep.subr.mxu0 %v1370
        %2022 = vmatpush1.msra.mxu0 %v1369
        %2023 = vmatprep.subr.mxu0 %v1368
        %2024 = vmatpush1.msra.mxu0 %v1367
        %2025 = vmatprep.subr.mxu0 %v1366
        %2026 = vmatpush1.msra.mxu0 %v1365
        %2027 = vmatprep.subr.mxu0 %v1364
        %2028 = vmatpush1.msra.mxu0 %v1363
        %2029 = vmatprep.subr.mxu0 %v1362
        %2030 = vmatpush1.msra.mxu0 %v1361
        %2031 = vmatprep.subr.mxu0 %v1360
        %2032 = vmatpush1.msra.mxu0 %v1359
        %2033 = vmatprep.subr.mxu0 %v1358
        %2034 = vmatpush1.msra.mxu0 %v1357
        %2035 = vmatprep.subr.mxu0 %v1356
        %2036 = vmatpush1.msra.mxu0 %v1355
        %2037 = vmatprep.subr.mxu0 %v1354
        %2038 = vmatpush1.msra.mxu0 %v1353
        %2039 = vmatprep.subr.mxu0 %v1416
        %2040 = vmatpush2.msra.mxu0 %v1415
        %2041 = vmatprep.subr.mxu0 %v1414
        %2042 = vmatpush2.msra.mxu0 %v1413
        %2043 = vmatprep.subr.mxu0 %v1412
        %2044 = vmatpush2.msra.mxu0 %v1411
        %2045 = vmatprep.subr.mxu0 %v1410
        %2046 = vmatpush2.msra.mxu0 %v1409
        %2047 = vmatprep.subr.mxu0 %v1408
        %2048 = vmatpush2.msra.mxu0 %v1407
        %2049 = vmatprep.subr.mxu0 %v1406
        %2050 = vmatpush2.msra.mxu0 %v1405
        %2051 = vmatprep.subr.mxu0 %v1404
        %2052 = vmatpush2.msra.mxu0 %v1403
        %2053 = vmatprep.subr.mxu0 %v1402
        %2054 = vmatpush2.msra.mxu0 %v1401
        %2055 = vmatprep.subr.mxu0 %v1400
        %2056 = vmatpush2.msra.mxu0 %v1399
        %2057 = vmatprep.subr.mxu0 %v1398
        %2058 = vmatpush2.msra.mxu0 %v1397
        %2059 = vmatprep.subr.mxu0 %v1396
        %2060 = vmatpush2.msra.mxu0 %v1395
        %2061 = vmatprep.subr.mxu0 %v1394
        %2062 = vmatpush2.msra.mxu0 %v1393
        %2063 = vmatprep.subr.mxu0 %v1392
        %2064 = vmatpush2.msra.mxu0 %v1391
        %2065 = vmatprep.subr.mxu0 %v1390
        %2066 = vmatpush2.msra.mxu0 %v1389
        %2067 = vmatprep.subr.mxu0 %v1388
        %2068 = vmatpush2.msra.mxu0 %v1387
        %2069 = vmatprep.subr.mxu0 %v1386
        %2070 = vmatpush2.msra.mxu0 %v1385
        %2071 = vmatprep.mubr.f32.mxu0 %v2005
        %2072 = vmatmul.mubr.f32.gmra.mxu0 %v2003
        %v2073 = vpop.f32.mrf.mxu0
        %v2074 = vadd.f32 0.0, %v2073
        %v2075 = vpop.f32.mrf.mxu0
        %v2076 = vadd.f32 0.0, %v2075
        %2077 = vdwg.mxu0
        %v2079 = vsel %vm652, %v569, 0
        %v2081 = vsel %vm749, %v472, 0
        %v2083 = vsel %vm749, %v474, 0
        %2085 = vmatprep.subr.mxu0 0.0
        %2086 = vmatpush1.msra.mxu0 0.0
        %2087 = vmatprep.subr.mxu0 0.0
        %2088 = vmatpush1.msra.mxu0 0.0
        %2089 = vmatprep.subr.mxu0 0.0
        %2090 = vmatpush1.msra.mxu0 0.0
        %2091 = vmatprep.subr.mxu0 0.0
        %2092 = vmatpush1.msra.mxu0 0.0
        %2093 = vmatprep.subr.mxu0 0.0
        %2094 = vmatpush1.msra.mxu0 0.0
        %2095 = vmatprep.subr.mxu0 0.0
        %2096 = vmatpush1.msra.mxu0 0.0
        %2097 = vmatprep.subr.mxu0 0.0
        %2098 = vmatpush1.msra.mxu0 0.0
        %2099 = vmatprep.subr.mxu0 0.0
        %2100 = vmatpush1.msra.mxu0 0.0
        %2101 = vmatprep.subr.mxu0 0.0
        %2102 = vmatpush1.msra.mxu0 0.0
        %2103 = vmatprep.subr.mxu0 0.0
        %2104 = vmatpush1.msra.mxu0 0.0
        %2105 = vmatprep.subr.mxu0 0.0
        %2106 = vmatpush1.msra.mxu0 0.0
        %2107 = vmatprep.subr.mxu0 0.0
        %2108 = vmatpush1.msra.mxu0 0.0
        %2109 = vmatprep.subr.mxu0 0.0
        %2110 = vmatpush1.msra.mxu0 0.0
        %2111 = vmatprep.subr.mxu0 0.0
        %2112 = vmatpush1.msra.mxu0 0.0
        %2113 = vmatprep.subr.mxu0 0.0
        %2114 = vmatpush1.msra.mxu0 0.0
        %2115 = vmatprep.subr.mxu0 %v2083
        %2116 = vmatpush1.msra.mxu0 %v2081
        %2117 = vmatprep.subr.mxu0 0.0
        %2118 = vmatpush2.msra.mxu0 0.0
        %2119 = vmatprep.subr.mxu0 0.0
        %2120 = vmatpush2.msra.mxu0 0.0
        %2121 = vmatprep.subr.mxu0 0.0
        %2122 = vmatpush2.msra.mxu0 0.0
        %2123 = vmatprep.subr.mxu0 0.0
        %2124 = vmatpush2.msra.mxu0 0.0
        %2125 = vmatprep.subr.mxu0 0.0
        %2126 = vmatpush2.msra.mxu0 0.0
        %2127 = vmatprep.subr.mxu0 0.0
        %2128 = vmatpush2.msra.mxu0 0.0
        %2129 = vmatprep.subr.mxu0 0.0
        %2130 = vmatpush2.msra.mxu0 0.0
        %2131 = vmatprep.subr.mxu0 0.0
        %2132 = vmatpush2.msra.mxu0 0.0
        %2133 = vmatprep.subr.mxu0 0.0
        %2134 = vmatpush2.msra.mxu0 0.0
        %2135 = vmatprep.subr.mxu0 0.0
        %2136 = vmatpush2.msra.mxu0 0.0
        %2137 = vmatprep.subr.mxu0 0.0
        %2138 = vmatpush2.msra.mxu0 0.0
        %2139 = vmatprep.subr.mxu0 0.0
        %2140 = vmatpush2.msra.mxu0 0.0
        %2141 = vmatprep.subr.mxu0 0.0
        %2142 = vmatpush2.msra.mxu0 0.0
        %2143 = vmatprep.subr.mxu0 0.0
        %2144 = vmatpush2.msra.mxu0 0.0
        %2145 = vmatprep.subr.mxu0 0.0
        %2146 = vmatpush2.msra.mxu0 0.0
        %2147 = vmatprep.subr.mxu0 0.0
        %2148 = vmatpush2.msra.mxu0 0.0
        %2149 = vmatprep.mubr.f32.mxu0 0.0
        %2150 = vmatmul.mubr.f32.gmra.mxu0 %v2079
        %v2151 = vpop.f32.mrf.mxu0
        %v2152 = vadd.f32 0.0, %v2151
        %v2153 = vpop.f32.mrf.mxu0
        %v2154 = vadd.f32 0.0, %v2153
        %2155 = vdwg.mxu0
        %2156 = vmatprep.subr.mxu0 %v1864
        %2157 = vmatpush1.xpose.msra.mxu0 %v1863
        %2158 = vmatprep.subr.mxu0 %v1862
        %2159 = vmatpush1.xpose.msra.mxu0 %v1861
        %2160 = vmatprep.subr.mxu0 %v1860
        %2161 = vmatpush1.xpose.msra.mxu0 %v1859
        %2162 = vmatprep.subr.mxu0 %v1858
        %2163 = vmatpush1.xpose.msra.mxu0 %v1857
        %2164 = vmatprep.subr.mxu0 %v1856
        %2165 = vmatpush1.xpose.msra.mxu0 %v1855
        %2166 = vmatprep.subr.mxu0 %v1854
        %2167 = vmatpush1.xpose.msra.mxu0 %v1853
        %2168 = vmatprep.subr.mxu0 %v1852
        %2169 = vmatpush1.xpose.msra.mxu0 %v1851
        %2170 = vmatprep.subr.mxu0 %v1850
        %2171 = vmatpush1.xpose.msra.mxu0 %v1849
        %2172 = vmatprep.subr.mxu0 %v1848
        %2173 = vmatpush1.xpose.msra.mxu0 %v1847
        %2174 = vmatprep.subr.mxu0 %v1846
        %2175 = vmatpush1.xpose.msra.mxu0 %v1845
        %2176 = vmatprep.subr.mxu0 %v1844
        %2177 = vmatpush1.xpose.msra.mxu0 %v1843
        %2178 = vmatprep.subr.mxu0 %v1842
        %2179 = vmatpush1.xpose.msra.mxu0 %v1841
        %2180 = vmatprep.subr.mxu0 %v1840
        %2181 = vmatpush1.xpose.msra.mxu0 %v1839
        %2182 = vmatprep.subr.mxu0 %v1838
        %2183 = vmatpush1.xpose.msra.mxu0 %v1837
        %2184 = vmatprep.subr.mxu0 %v1836
        %2185 = vmatpush1.xpose.msra.mxu0 %v1835
        %2186 = vmatprep.subr.mxu0 %v1834
        %2187 = vmatpush1.xpose.msra.mxu0 %v1833
        %2188 = vmatprep.subr.mxu0 %v1896
        %2189 = vmatpush2.xpose.msra.mxu0 %v1895
        %2190 = vmatprep.subr.mxu0 %v1894
        %2191 = vmatpush2.xpose.msra.mxu0 %v1893
        %2192 = vmatprep.subr.mxu0 %v1892
        %2193 = vmatpush2.xpose.msra.mxu0 %v1891
        %2194 = vmatprep.subr.mxu0 %v1890
        %2195 = vmatpush2.xpose.msra.mxu0 %v1889
        %2196 = vmatprep.subr.mxu0 %v1888
        %2197 = vmatpush2.xpose.msra.mxu0 %v1887
        %2198 = vmatprep.subr.mxu0 %v1886
        %2199 = vmatpush2.xpose.msra.mxu0 %v1885
        %2200 = vmatprep.subr.mxu0 %v1884
        %2201 = vmatpush2.xpose.msra.mxu0 %v1883
        %2202 = vmatprep.subr.mxu0 %v1882
        %2203 = vmatpush2.xpose.msra.mxu0 %v1881
        %2204 = vmatprep.subr.mxu0 %v1880
        %2205 = vmatpush2.xpose.msra.mxu0 %v1879
        %2206 = vmatprep.subr.mxu0 %v1878
        %2207 = vmatpush2.xpose.msra.mxu0 %v1877
        %2208 = vmatprep.subr.mxu0 %v1876
        %2209 = vmatpush2.xpose.msra.mxu0 %v1875
        %2210 = vmatprep.subr.mxu0 %v1874
        %2211 = vmatpush2.xpose.msra.mxu0 %v1873
        %2212 = vmatprep.subr.mxu0 %v1872
        %2213 = vmatpush2.xpose.msra.mxu0 %v1871
        %2214 = vmatprep.subr.mxu0 %v1870
        %2215 = vmatpush2.xpose.msra.mxu0 %v1869
        %2216 = vmatprep.subr.mxu0 %v1868
        %2217 = vmatpush2.xpose.msra.mxu0 %v1867
        %2218 = vmatprep.subr.mxu0 %v1866
        %2219 = vmatpush2.xpose.msra.mxu0 %v1865
        %2220 = vmatprep.mubr.f32.mxu0 %v2154
        %2221 = vmatmul.mubr.f32.gmra.mxu0 %v2152
        %v2222 = vpop.f32.mrf.mxu0
        %v2223 = vadd.f32 0.0, %v2222
        %v2224 = vpop.f32.mrf.mxu0
        %v2225 = vadd.f32 0.0, %v2224
        %2226 = vdwg.mxu0
        %v2227 = vld [vmem:[%s4] sm:$0xf]
        %v2228 = vld [vmem:[%s5] sm:$0xf]
        %2230 = vset.pattern.permute.xlu0 0
        %2231 = vperm.xlu0 %2230, %v2228
        %v2232 = vpop.permute.xlu0 %2231
        %v2235 = vsel %vm652, %v2227, 0
        %v2238 = vsel %vm749, %v2074, 0
        %v2241 = vsel %vm749, %v2076, 0
        %v2244 = vsel %vm749, %v2223, 0
        %v2247 = vsel %vm749, %v2225, 0
        %2249 = vmatprep.subr.mxu0 0.0
        %2250 = vmatpush1.msra.mxu0 0.0
        %2251 = vmatprep.subr.mxu0 0.0
        %2252 = vmatpush1.msra.mxu0 0.0
        %2253 = vmatprep.subr.mxu0 0.0
        %2254 = vmatpush1.msra.mxu0 0.0
        %2255 = vmatprep.subr.mxu0 0.0
        %2256 = vmatpush1.msra.mxu0 0.0
        %2257 = vmatprep.subr.mxu0 0.0
        %2258 = vmatpush1.msra.mxu0 0.0
        %2259 = vmatprep.subr.mxu0 0.0
        %2260 = vmatpush1.msra.mxu0 0.0
        %2261 = vmatprep.subr.mxu0 0.0
        %2262 = vmatpush1.msra.mxu0 0.0
        %2263 = vmatprep.subr.mxu0 0.0
        %2264 = vmatpush1.msra.mxu0 0.0
        %2265 = vmatprep.subr.mxu0 0.0
        %2266 = vmatpush1.msra.mxu0 0.0
        %2267 = vmatprep.subr.mxu0 0.0
        %2268 = vmatpush1.msra.mxu0 0.0
        %2269 = vmatprep.subr.mxu0 0.0
        %2270 = vmatpush1.msra.mxu0 0.0
        %2271 = vmatprep.subr.mxu0 0.0
        %2272 = vmatpush1.msra.mxu0 0.0
        %2273 = vmatprep.subr.mxu0 0.0
        %2274 = vmatpush1.msra.mxu0 0.0
        %2275 = vmatprep.subr.mxu0 0.0
        %2276 = vmatpush1.msra.mxu0 0.0
        %2277 = vmatprep.subr.mxu0 0.0
        %2278 = vmatpush1.msra.mxu0 0.0
        %2279 = vmatprep.subr.mxu0 %v2241
        %2280 = vmatpush1.msra.mxu0 %v2238
        %2281 = vmatprep.subr.mxu0 0.0
        %2282 = vmatpush2.msra.mxu0 0.0
        %2283 = vmatprep.subr.mxu0 0.0
        %2284 = vmatpush2.msra.mxu0 0.0
        %2285 = vmatprep.subr.mxu0 0.0
        %2286 = vmatpush2.msra.mxu0 0.0
        %2287 = vmatprep.subr.mxu0 0.0
        %2288 = vmatpush2.msra.mxu0 0.0
        %2289 = vmatprep.subr.mxu0 0.0
        %2290 = vmatpush2.msra.mxu0 0.0
        %2291 = vmatprep.subr.mxu0 0.0
        %2292 = vmatpush2.msra.mxu0 0.0
        %2293 = vmatprep.subr.mxu0 0.0
        %2294 = vmatpush2.msra.mxu0 0.0
        %2295 = vmatprep.subr.mxu0 0.0
        %2296 = vmatpush2.msra.mxu0 0.0
        %2297 = vmatprep.subr.mxu0 0.0
        %2298 = vmatpush2.msra.mxu0 0.0
        %2299 = vmatprep.subr.mxu0 0.0
        %2300 = vmatpush2.msra.mxu0 0.0
        %2301 = vmatprep.subr.mxu0 0.0
        %2302 = vmatpush2.msra.mxu0 0.0
        %2303 = vmatprep.subr.mxu0 0.0
        %2304 = vmatpush2.msra.mxu0 0.0
        %2305 = vmatprep.subr.mxu0 0.0
        %2306 = vmatpush2.msra.mxu0 0.0
        %2307 = vmatprep.subr.mxu0 0.0
        %2308 = vmatpush2.msra.mxu0 0.0
        %2309 = vmatprep.subr.mxu0 0.0
        %2310 = vmatpush2.msra.mxu0 0.0
        %2311 = vmatprep.subr.mxu0 0.0
        %2312 = vmatpush2.msra.mxu0 0.0
        %2313 = vmatprep.mubr.f32.mxu0 0.0
        %2314 = vmatmul.mubr.f32.gmra.mxu0 %v2235
        %v2315 = vpop.f32.mrf.mxu0
        %v2316 = vadd.f32 %v2232, %v2315
        %v2317 = vpop.f32.mrf.mxu0
        %v2318 = vadd.f32 %v2232, %v2317
        %2319 = vdwg.mxu0
        %2320 = vmatprep.subr.mxu0 0.0
        %2321 = vmatpush1.msra.mxu0 0.0
        %2322 = vmatprep.subr.mxu0 0.0
        %2323 = vmatpush1.msra.mxu0 0.0
        %2324 = vmatprep.subr.mxu0 0.0
        %2325 = vmatpush1.msra.mxu0 0.0
        %2326 = vmatprep.subr.mxu0 0.0
        %2327 = vmatpush1.msra.mxu0 0.0
        %2328 = vmatprep.subr.mxu0 0.0
        %2329 = vmatpush1.msra.mxu0 0.0
        %2330 = vmatprep.subr.mxu0 0.0
        %2331 = vmatpush1.msra.mxu0 0.0
        %2332 = vmatprep.subr.mxu0 0.0
        %2333 = vmatpush1.msra.mxu0 0.0
        %2334 = vmatprep.subr.mxu0 0.0
        %2335 = vmatpush1.msra.mxu0 0.0
        %2336 = vmatprep.subr.mxu0 0.0
        %2337 = vmatpush1.msra.mxu0 0.0
        %2338 = vmatprep.subr.mxu0 0.0
        %2339 = vmatpush1.msra.mxu0 0.0
        %2340 = vmatprep.subr.mxu0 0.0
        %2341 = vmatpush1.msra.mxu0 0.0
        %2342 = vmatprep.subr.mxu0 0.0
        %2343 = vmatpush1.msra.mxu0 0.0
        %2344 = vmatprep.subr.mxu0 0.0
        %2345 = vmatpush1.msra.mxu0 0.0
        %2346 = vmatprep.subr.mxu0 0.0
        %2347 = vmatpush1.msra.mxu0 0.0
        %2348 = vmatprep.subr.mxu0 0.0
        %2349 = vmatpush1.msra.mxu0 0.0
        %2350 = vmatprep.subr.mxu0 %v2247
        %2351 = vmatpush1.msra.mxu0 %v2244
        %2352 = vmatprep.subr.mxu0 0.0
        %2353 = vmatpush2.msra.mxu0 0.0
        %2354 = vmatprep.subr.mxu0 0.0
        %2355 = vmatpush2.msra.mxu0 0.0
        %2356 = vmatprep.subr.mxu0 0.0
        %2357 = vmatpush2.msra.mxu0 0.0
        %2358 = vmatprep.subr.mxu0 0.0
        %2359 = vmatpush2.msra.mxu0 0.0
        %2360 = vmatprep.subr.mxu0 0.0
        %2361 = vmatpush2.msra.mxu0 0.0
        %2362 = vmatprep.subr.mxu0 0.0
        %2363 = vmatpush2.msra.mxu0 0.0
        %2364 = vmatprep.subr.mxu0 0.0
        %2365 = vmatpush2.msra.mxu0 0.0
        %2366 = vmatprep.subr.mxu0 0.0
        %2367 = vmatpush2.msra.mxu0 0.0
        %2368 = vmatprep.subr.mxu0 0.0
        %2369 = vmatpush2.msra.mxu0 0.0
        %2370 = vmatprep.subr.mxu0 0.0
        %2371 = vmatpush2.msra.mxu0 0.0
        %2372 = vmatprep.subr.mxu0 0.0
        %2373 = vmatpush2.msra.mxu0 0.0
        %2374 = vmatprep.subr.mxu0 0.0
        %2375 = vmatpush2.msra.mxu0 0.0
        %2376 = vmatprep.subr.mxu0 0.0
        %2377 = vmatpush2.msra.mxu0 0.0
        %2378 = vmatprep.subr.mxu0 0.0
        %2379 = vmatpush2.msra.mxu0 0.0
        %2380 = vmatprep.subr.mxu0 0.0
        %2381 = vmatpush2.msra.mxu0 0.0
        %2382 = vmatprep.subr.mxu0 0.0
        %2383 = vmatpush2.msra.mxu0 0.0
        %2384 = vmatprep.mubr.f32.mxu0 0.0
        %2385 = vmatmul.mubr.f32.gmra.mxu0 %v2235
        %v2386 = vpop.f32.mrf.mxu0
        %v2387 = vadd.f32 %v2232, %v2386
        %v2388 = vpop.f32.mrf.mxu0
        %v2389 = vadd.f32 %v2232, %v2388
        %2390 = vdwg.mxu0
        %v2393 = vcombine.low %v2316, %v2318
        %v2395 = vadd.f32 %v308, %v2393
        %2396 = vst [vmem:[%s290] sm:$0xff] %v2395
        %v2399 = vcombine.low %v2387, %v2389
        %v2401 = vadd.f32 %v309, %v2399
        %2402 = vst [vmem:[%s297] sm:$0xff] %v2401
        %s2403 = sand.u32 %s169, 1
        %s2404 = scalar_lea.sflag [#allocation3], %s2403
        %s2405 = sand.u32 %s169, 1
        %s2406 = smul.addr %s2405, 8
        %s2407 = scalar_lea.vmem [#allocation2], %s2406
        %s2408 = sand.u32 %s195, 1
        %s2409 = scalar_lea.sflag [#allocation5], %s2408
        %s2410 = sand.u32 %s195, 1
        %s2411 = smul.addr %s2410, 8
        %s2412 = scalar_lea.vmem [#allocation4], %s2411
        // Predicated region
        $region45: #{tpu_custom_call.1} parent=43 // pred_check
          %p2413 = pneg %p179
        $region46: #{tpu_custom_call.1} parent=43 // pred_check_branch
          %2415 = sbr.rel (%p2413) target = $region48
        $region47: #{tpu_custom_call.1} parent=43 // pred_region
          %s2417 = ssub.s32 128, 128
          %2418 = vsyncadd %s2404, %s2417
          %s2419 = smul.addr %s25, 2
          %s2420 = smul.addr %s2419, 64
          %s2421 = scalar_lea.hbm %s6, %s2420
          %s2423 = sshll.u32 %s2407, 4
          %s2424 = int_to_ptr.vmem [resolvable:$true] %s2423
          %2426 = dma.vmem_to_hbm [thread:$0]  %s2424, 128, %s2421, %s2404
        $region48: #{tpu_custom_call.1} parent=43 // pred_fallthru
          _
        // Predicated region
        $region49: #{tpu_custom_call.1} parent=43 // pred_check
          %p2427 = pneg %p205
        $region50: #{tpu_custom_call.1} parent=43 // pred_check_branch
          %2429 = sbr.rel (%p2427) target = $region52
        $region51: #{tpu_custom_call.1} parent=43 // pred_region
          %s2431 = ssub.s32 128, 128
          %2432 = vsyncadd %s2409, %s2431
          %s2433 = smul.addr %s25, 2
          %s2434 = smul.addr %s2433, 64
          %s2435 = scalar_lea.hbm %s7, %s2434
          %s2437 = sshll.u32 %s2412, 4
          %s2438 = int_to_ptr.vmem [resolvable:$true] %s2437
          %2440 = dma.vmem_to_hbm [thread:$0]  %s2438, 128, %s2435, %s2409
        $region52: #{tpu_custom_call.1} parent=43 // pred_fallthru
          _
      $region44: #{tpu_custom_call.1} parent=5 // pred_fallthru
        _
      %p2441 = scmp.le.s32.totalorder 2, %s20
      // Predicated region
      $region53: #{tpu_custom_call.1} parent=5 // pred_check
        %p2442 = pneg %p2441
      $region54: #{tpu_custom_call.1} parent=5 // pred_check_branch
        %2444 = sbr.rel (%p2442) target = $region56
      $region55: #{tpu_custom_call.1} parent=5 // pred_region
        %s2445 = ssub.s32 %s20, 2
        // Predicated region
        $region57: #{tpu_custom_call.1} parent=55 // pred_check
          %p2446 = pneg %p185
        $region58: #{tpu_custom_call.1} parent=55 // pred_check_branch
          %2448 = sbr.rel (%p2446) target = $region60
        $region59: #{tpu_custom_call.1} parent=55 // pred_region
          %s2449 = sand.u32 %s170, 1
          %s2450 = scalar_lea.sflag [#allocation3], %s2449
          %s2451 = sand.u32 %s170, 1
          %s2452 = smul.addr %s2451, 8
          %s2453 = scalar_lea.vmem [#allocation2], %s2452
          %2454 = dma.done %s2450, 128
        $region60: #{tpu_custom_call.1} parent=55 // pred_fallthru
          _
        // Predicated region
        $region61: #{tpu_custom_call.1} parent=55 // pred_check
          %p2455 = pneg %p211
        $region62: #{tpu_custom_call.1} parent=55 // pred_check_branch
          %2457 = sbr.rel (%p2455) target = $region64
        $region63: #{tpu_custom_call.1} parent=55 // pred_region
          %s2458 = sand.u32 %s196, 1
          %s2459 = scalar_lea.sflag [#allocation5], %s2458
          %s2460 = sand.u32 %s196, 1
          %s2461 = smul.addr %s2460, 8
          %s2462 = scalar_lea.vmem [#allocation4], %s2461
          %2463 = dma.done %s2459, 128
        $region64: #{tpu_custom_call.1} parent=55 // pred_fallthru
          _
      $region56: #{tpu_custom_call.1} parent=5 // pred_fallthru
        _
    $region6: #{tpu_custom_call.1} parent=1 // loop_footer
      %s24 = sadd.s32 1, %s20
    $region7: #{tpu_custom_call.1} parent=1 // loop_footer_branch
      %19 = sbr.rel target = $region3
    $region8: #{tpu_custom_call.1} parent=1 // loop_exit
      _
    %2464 = vsyncpa [#allocation3], 1
    %s2465 = scalar_lea.sflag [#allocation3], 1
    %2466 = vsyncpa %s2465, 1
    %2467 = vsyncpa [#allocation5], 1
    %s2468 = scalar_lea.sflag [#allocation5], 1
    %2469 = vsyncpa %s2468, 1

</llo_original>
